<compile_context>
chip_gen: v5e
topology: v5e:2x2
jax: 0.10.0
libtpu: 0.0.40
codegen_flags: <defaults>
</compile_context>

<pallas_src>
import functools

import jax
import jax.numpy as jnp
from jax import lax
from jax.experimental import pallas as pl
from jax.experimental.pallas import tpu as pltpu

# ----------------------------- config ------------------------------------ #
B, S, H = 2, 8, 32            # batch, seq, hidden
BS = B * S                    # flattened rows
NH, HD = 4, H // 4            # heads, head dim
FF = 64                       # FFN intermediate
VOCAB = 50
NUM_LABELS = 3                # len(all_agents) - agents_extended
AGENTS_EXT = 2                # agents_extended
CLASS_DIM = 8                 # model_config['classification_dim'] (kept small)
C = NUM_LABELS + AGENTS_EXT   # total logits after torch.cat
HEAD_IN = C * CLASS_DIM       # adapter output channels (both paths) = 40
LN_EPS = 1e-12                # BERT LayerNorm eps
LANE = 128
SLAB_ROWS = 64                # >= max(H, FF, HEAD_IN, padded VOCAB)

# weight-slab: 128-lane-aligned column blocks
BLK_WEMB, BLK_POS, BLK_WQ, BLK_WK = 0, 1, 2, 3
BLK_WVO0 = 4                  # blocks 4..7: per-head  Wv_h @ Wo_h   (H, H)
BLK_W1, BLK_W2, BLK_WAD, BLK_WHEAD, BLK_VEC = 8, 9, 10, 11, 12
NBLK = 13
WCOLS = NBLK * LANE           # 1664

# vector-block rows (inside BLK_VEC)
R_BQ, R_BK, R_BATTN, R_B1, R_B2 = 0, 1, 2, 3, 4
R_LNE_G, R_LNE_B, R_LN1_G, R_LN1_B, R_LN2_G, R_LN2_B = 5, 6, 7, 8, 9, 10
R_BAD, R_BHEAD = 11, 12

# data-slab (per-call dynamic inputs), 128-lane-aligned sections
COL_BIAS = 0                  # rows 0:NH*BS, cols 0:BS : pre-tiled additive attention bias
COL_IDS = LANE                # rows 0:BS,   col  128  : token ids (as f32)
COL_LABELS = 2 * LANE         # rows 0:B,    cols 256:256+C : label indices (f32, -1 pad)
DATA_COLS = 3 * LANE

OUT_ROWS = 8                  # single (8,128) output vreg: logits rows 0:B, loss at [B,0]


# --------------------------- kernel helpers ------------------------------- #
def _layer_norm(x, g, b):
    mu = jnp.mean(x, axis=-1, keepdims=True)
    var = jnp.mean(jnp.square(x - mu), axis=-1, keepdims=True)
    return (x - mu) * lax.rsqrt(var + LN_EPS) * g + b


def _gelu(x):
    # TODO(synk): nn.GELU() is erf-based; tanh approximation used for Mosaic-safe lowering.
    c = 0.7978845608028654  # sqrt(2/pi)
    return 0.5 * x * (1.0 + jnp.tanh(c * (x + 0.044715 * x * x * x)))


# ------------------------- fused forward kernel --------------------------- #
def fused_kernel(data_ref, w_ref, out_ref):
    f32 = jnp.float32

    def wblk(blk, rows, cols):            # 128-lane-aligned static weight slice (row 0 start)
        c0 = blk * LANE
        return w_ref[0:rows, c0:c0 + cols]

    vec = w_ref[0:16, BLK_VEC * LANE: BLK_VEC * LANE + LANE]   # bias / LN vector block
    vrow = lambda r, n: vec[r:r + 1, 0:n]

    # ---- embedding lookup (one-hot matmul gather) + positional + LN ----
    ids = data_ref[0:BS, COL_IDS:COL_IDS + 1]                            # (BS,1) f32
    vocab_iota = lax.broadcasted_iota(jnp.int32, (BS, SLAB_ROWS), 1).astype(f32)
    onehot = (ids == vocab_iota).astype(f32)                             # (BS,64)
    x = jnp.dot(onehot, wblk(BLK_WEMB, SLAB_ROWS, H), preferred_element_type=f32)
    x = x + wblk(BLK_POS, BS, H)
    x = _layer_norm(x, vrow(R_LNE_G, H), vrow(R_LNE_B, H))               # (BS,H)

    # ---- attention: scale folded into Wq/bq, Wv_h@Wo_h and bv@Wo+bo folded at pack time ----
    q = jnp.dot(x, wblk(BLK_WQ, H, H), preferred_element_type=f32) + vrow(R_BQ, H)
    k = jnp.dot(x, wblk(BLK_WK, H, H), preferred_element_type=f32) + vrow(R_BK, H)
    scores = [lax.dot_general(q[:, h * HD:(h + 1) * HD], k[:, h * HD:(h + 1) * HD],
                              (((1,), (1,)), ((), ())), preferred_element_type=f32)
              for h in range(NH)]                                        # NH x (BS,BS)
    # one softmax over all heads: sublane-stacked scores + pre-tiled additive bias
    s = jnp.concatenate(scores, axis=0) + data_ref[0:NH * BS, COL_BIAS:COL_BIAS + BS]
    s = s - jnp.max(s, axis=-1, keepdims=True)
    p = jnp.exp(s)
    p = p * pl.reciprocal(jnp.sum(p, axis=-1, keepdims=True), approx=True)   # (NH*BS,BS)

    attn = None
    for h in range(NH):                                                  # tiny static unroll
        vo_h = jnp.dot(x, wblk(BLK_WVO0 + h, H, H), preferred_element_type=f32)  # x@(Wv_h Wo_h)
        t = jnp.dot(p[h * BS:(h + 1) * BS, :], vo_h, preferred_element_type=f32)
        attn = t if attn is None else attn + t
    attn = attn + vrow(R_BATTN, H)                                       # bv@Wo + bo (folded)

    h1 = _layer_norm(x + attn, vrow(R_LN1_G, H), vrow(R_LN1_B, H))
    ffn = jnp.dot(h1, wblk(BLK_W1, H, FF), preferred_element_type=f32) + vrow(R_B1, FF)
    ffn = _gelu(ffn)
    ffn = jnp.dot(ffn, wblk(BLK_W2, FF, H), preferred_element_type=f32) + vrow(R_B2, H)
    hidden = _layer_norm(h1 + ffn, vrow(R_LN2_G, H), vrow(R_LN2_B, H))   # (BS,H)

    # ---- CLS pooling: static sublane-aligned row slices (no selection matmul) ----
    pooled = jnp.concatenate([hidden[b * S:b * S + 1, :] for b in range(B)], axis=0)  # (B,H)
    # TODO(synk): nn.Dropout is identity in eval mode; training-mode RNG dropout omitted.

    # ---- adapters (Conv1d(1, C*D, H) == dense) + GELU, grouped 1x1 conv == block-diag ----
    act = _gelu(jnp.dot(pooled, wblk(BLK_WAD, H, HEAD_IN), preferred_element_type=f32)
                + vrow(R_BAD, HEAD_IN))                                  # (B, C*D)
    logits = jnp.dot(act, wblk(BLK_WHEAD, HEAD_IN, C), preferred_element_type=f32) \
             + vrow(R_BHEAD, C)                                          # (B, C)

    # ---- MultiLabelMarginLoss(reduction='mean'), vectorized ----
    y = data_ref[0:B, COL_LABELS:COL_LABELS + C]                         # (B,C) f32 indices
    nonneg = (y >= 0.0).astype(f32)
    tri = (lax.broadcasted_iota(jnp.int32, (C, C), 0) <=
           lax.broadcasted_iota(jnp.int32, (C, C), 1)).astype(f32)
    prefix = jnp.dot(nonneg, tri, preferred_element_type=f32)            # prefix nonneg count
    colf = lax.broadcasted_iota(jnp.int32, (B, C), 1).astype(f32)
    valid = (prefix > colf + 0.5).astype(f32)                            # contiguous prefix

    oh3 = (y[:, :, None] == colf[:, None, :]).astype(f32)                # (B, slot, class)
    is_target = jnp.sum(oh3 * valid[:, :, None], axis=1)                 # (B, C)
    not_target = (is_target < 0.5).astype(f32)
    x_t = jnp.sum(oh3 * logits[:, None, :], axis=2)                      # x[b, y[b,j]]
    margins = jnp.maximum(0.0, 1.0 - x_t[:, :, None] + logits[:, None, :])   # (B,C,C)
    per_b = jnp.sum(jnp.sum(margins * (valid[:, :, None] * not_target[:, None, :]),
                            axis=2), axis=1, keepdims=True)              # (B,1)
    loss = jnp.sum(per_b, axis=0, keepdims=True) * (1.0 / float(B * C))  # (1,1)

    # ---- single lane-dense (8,128) output: logits rows 0:B, loss at [B,0] ----
    out_ref[...] = jnp.concatenate([
        jnp.concatenate([logits, jnp.zeros((B, LANE - C), f32)], axis=1),
        jnp.concatenate([loss, jnp.zeros((1, LANE - 1), f32)], axis=1),
        jnp.zeros((OUT_ROWS - B - 1, LANE), f32),
    ], axis=0)


# ------------------------------ wrapper ------------------------------------ #
def transformer_model_pairwise_forward(input_ids, attention_mask, labels, params,
                                       pos_weight=None):
    del pos_weight  # accepted for torch-signature parity; unused by this module
    f32 = jnp.float32

    # static block-diagonal batch structure + padding mask folded OUTSIDE the kernel (XLA)
    batch_of = jnp.arange(BS) // S
    keep = attention_mask.reshape(BS) > 0.5
    allowed = (batch_of[:, None] == batch_of[None, :]) & keep[None, :]
    neg_bias = jnp.where(allowed, 0.0, -1e9).astype(f32)                 # (BS, BS)

    data = jnp.zeros((SLAB_ROWS, DATA_COLS), f32)
    data = data.at[0:NH * BS, COL_BIAS:COL_BIAS + BS].set(jnp.tile(neg_bias, (NH, 1)))
    data = data.at[0:BS, COL_IDS].set(input_ids.reshape(BS).astype(f32))
    data = data.at[0:B, COL_LABELS:COL_LABELS + C].set(labels.astype(f32))

    vmem = functools.partial(pl.BlockSpec, memory_space=pltpu.MemorySpace.VMEM)
    out = pl.pallas_call(
        fused_kernel,
        out_shape=jax.ShapeDtypeStruct((OUT_ROWS, LANE), f32),
        in_specs=[vmem(), vmem()],
        out_specs=vmem(),
    )(data, params["w_slab"])
    return out[0:B, 0:C], out[B, 0]


# ----------------------- parameter packing (one-time) ---------------------- #
def pack_params(word_emb, pos_emb, wq, wk, wv, bq, bk, bv, wo, bo,
                w1, b1, w2, b2, w_adapter, b_adapter, w_ext_adapter,
                b_ext_adapter, w_cls, b_cls, w_ext_cls, b_ext_cls):
    f32 = jnp.float32
    slab = jnp.zeros((SLAB_ROWS, WCOLS), f32)

    def put(s, blk, mat):
        mat = jnp.asarray(mat, f32)
        r, c = mat.shape
        return s.at[0:r, blk * LANE: blk * LANE + c].set(mat)

    def put_vec(s, row, v):
        v = jnp.asarray(v, f32).reshape(1, -1)
        return s.at[row:row + 1, BLK_VEC * LANE: BLK_VEC * LANE + v.shape[1]].set(v)

    scale = 1.0 / float(HD) ** 0.5
    slab = put(slab, BLK_WEMB, word_emb)                         # (VOCAB,H), zero-padded rows
    slab = put(slab, BLK_POS, jnp.tile(pos_emb, (B, 1)))         # (BS,H)
    slab = put(slab, BLK_WQ, wq * scale)                         # softmax scale folded here
    slab = put(slab, BLK_WK, wk)
    for h in range(NH):                                          # fold Wv_h @ Wo_h (pack time)
        slab = put(slab, BLK_WVO0 + h,
                   wv[:, h * HD:(h + 1) * HD] @ wo[h * HD:(h + 1) * HD, :])
    slab = put(slab, BLK_W1, w1)                                 # (H,FF)
    slab = put(slab, BLK_W2, w2)                                 # (FF,H) un-transposed
    slab = put(slab, BLK_WAD, jnp.concatenate([w_adapter, w_ext_adapter], axis=0).T)

    # grouped Conv1d(C*D -> C, kernel=1, groups per path) == block-diagonal dense
    w_head = jnp.zeros((HEAD_IN, C), f32)
    for g in range(NUM_LABELS):
        w_head = w_head.at[g * CLASS_DIM:(g + 1) * CLASS_DIM, g].set(w_cls[g])
    off = NUM_LABELS * CLASS_DIM
    for g in range(AGENTS_EXT):
        w_head = w_head.at[off + g * CLASS_DIM: off + (g + 1) * CLASS_DIM,
                           NUM_LABELS + g].set(w_ext_cls[g])
    slab = put(slab, BLK_WHEAD, w_head)

    ones_h, zeros_h = jnp.ones((H,), f32), jnp.zeros((H,), f32)
    slab = put_vec(slab, R_BQ, bq * scale)
    slab = put_vec(slab, R_BK, bk)
    slab = put_vec(slab, R_BATTN, bv @ wo + bo)                  # softmax rows sum to 1
    slab = put_vec(slab, R_B1, b1)
    slab = put_vec(slab, R_B2, b2)
    slab = put_vec(slab, R_LNE_G, ones_h); slab = put_vec(slab, R_LNE_B, zeros_h)
    slab = put_vec(slab, R_LN1_G, ones_h); slab = put_vec(slab, R_LN1_B, zeros_h)
    slab = put_vec(slab, R_LN2_G, ones_h); slab = put_vec(slab, R_LN2_B, zeros_h)
    slab = put_vec(slab, R_BAD, jnp.concatenate([b_adapter, b_ext_adapter]))
    slab = put_vec(slab, R_BHEAD, jnp.concatenate([b_cls, b_ext_cls]))
    return {"w_slab": slab}


# -------------------------------- main ------------------------------------ #
if __name__ == "__main__":
    key = jax.random.PRNGKey(0)
    ks = jax.random.split(key, 20)
    init = lambda k, shape: (0.02 * jax.random.normal(k, shape)).astype(jnp.float32)

    # synthetic 1-layer BERT parameters (deterministic; `bert` is injected in torch)
    word_emb = init(ks[0], (VOCAB, H))
    pos_emb = init(ks[1], (S, H))
    wq = init(ks[2], (H, H)); wk = init(ks[3], (H, H)); wv = init(ks[4], (H, H))
    bq = init(ks[5], (H,)); bk = init(ks[6], (H,)); bv = init(ks[7], (H,))
    wo = init(ks[8], (H, H)); bo = init(ks[9], (H,))
    w1 = init(ks[10], (H, FF)); b1 = init(ks[11], (FF,))
    w2 = init(ks[12], (FF, H)); b2 = init(ks[13], (H,))

    # head weights (torch Conv1d weights with the singleton dims squeezed)
    w_adapter = init(ks[14], (NUM_LABELS * CLASS_DIM, H))        # Conv1d(1, N*D, H)
    b_adapter = init(ks[15], (NUM_LABELS * CLASS_DIM,))
    w_ext_adapter = init(ks[16], (AGENTS_EXT * CLASS_DIM, H))    # Conv1d(1, AE*D, H)
    b_ext_adapter = init(ks[17], (AGENTS_EXT * CLASS_DIM,))
    k18 = jax.random.split(ks[18], 4)
    w_cls = init(k18[0], (NUM_LABELS, CLASS_DIM))                # Conv1d(N*D, N, 1, groups=N)
    b_cls = init(k18[1], (NUM_LABELS,))
    w_ext_cls = init(k18[2], (AGENTS_EXT, CLASS_DIM))            # Conv1d(AE*D, AE, 1, groups=AE)
    b_ext_cls = init(k18[3], (AGENTS_EXT,))

    params = pack_params(word_emb, pos_emb, wq, wk, wv, bq, bk, bv, wo, bo,
                         w1, b1, w2, b2, w_adapter, b_adapter, w_ext_adapter,
                         b_ext_adapter, w_cls, b_cls, w_ext_cls, b_ext_cls)

    # inputs
    input_ids = jax.random.randint(ks[19], (B, S), 0, VOCAB, dtype=jnp.int32)
    attention_mask = jnp.array(
        [[1.0] * S, [1.0] * (S - 2) + [0.0] * 2], jnp.float32)           # (B, S)
    # MultiLabelMarginLoss targets: class indices, -1 padded (contiguous prefix valid)
    labels = jnp.array([[1, 3, -1, -1, -1],
                        [0, 2, 4, -1, -1]], jnp.int32)                   # (B, C)

    fwd = jax.jit(transformer_model_pairwise_forward)
    logits, loss = fwd(input_ids, attention_mask, labels, params)
    logits = jax.block_until_ready(logits)
    loss = jax.block_until_ready(loss)

    assert logits.shape == (B, C)
    assert bool(jnp.all(jnp.isfinite(logits))) and bool(jnp.isfinite(loss))
    print("KERNEL_OK")
</pallas_src>

<mosaic_0001>
module attributes {stable_mosaic.version = 11 : i64} {
  func.func @fused_kernel(%arg0: memref<64x384xf32, #tpu.memory_space<vmem>>, %arg1: memref<64x1664xf32, #tpu.memory_space<vmem>>, %arg2: memref<8x128xf32, #tpu.memory_space<vmem>>) attributes {dimension_semantics = [], scalar_prefetch = 0 : i64, scratch_operands = 0 : i64, tpu.core_type = #tpu.core_type<tc>} {
    %c0 = arith.constant 0 : index
    %c1536 = arith.constant 1536 : index
    %0 = vector.load %arg1[%c0, %c1536] : memref<64x1664xf32, #tpu.memory_space<vmem>>, vector<16x128xf32>
    %c0_0 = arith.constant 0 : index
    %c128 = arith.constant 128 : index
    %1 = vector.load %arg0[%c0_0, %c128] : memref<64x384xf32, #tpu.memory_space<vmem>>, vector<16x1xf32>
    %2 = tpu.iota {dimensions = array<i32: 1>} : vector<16x64xi32>
    %3 = arith.sitofp %2 : vector<16x64xi32> to vector<16x64xf32>
    %4 = vector.broadcast %1 : vector<16x1xf32> to vector<16x64xf32>
    %5 = arith.cmpf oeq, %4, %3 : vector<16x64xf32>
    %6 = arith.extui %5 : vector<16x64xi1> to vector<16x64xi32>
    %7 = arith.sitofp %6 : vector<16x64xi32> to vector<16x64xf32>
    %c0_1 = arith.constant 0 : index
    %c0_2 = arith.constant 0 : index
    %8 = vector.load %arg1[%c0_1, %c0_2] : memref<64x1664xf32, #tpu.memory_space<vmem>>, vector<64x32xf32>
    %cst = arith.constant dense<0.000000e+00> : vector<16x32xf32>
    %9 = tpu.matmul %7, %8, %cst {dimension_numbers = #tpu.dot_dimension_numbers<[1], [0], [0], [1], [0, 0, 1, 1], [], []>} : vector<16x64xf32>, vector<64x32xf32>, vector<16x32xf32> -> vector<16x32xf32>
    %c0_3 = arith.constant 0 : index
    %c128_4 = arith.constant 128 : index
    %10 = vector.load %arg1[%c0_3, %c128_4] : memref<64x1664xf32, #tpu.memory_space<vmem>>, vector<16x32xf32>
    %11 = arith.addf %9, %10 : vector<16x32xf32>
    %12 = vector.extract_strided_slice %0 {offsets = [5, 0], sizes = [1, 32], strides = [1, 1]} : vector<16x128xf32> to vector<1x32xf32>
    %13 = vector.extract_strided_slice %0 {offsets = [6, 0], sizes = [1, 32], strides = [1, 1]} : vector<16x128xf32> to vector<1x32xf32>
    %cst_5 = arith.constant dense<0.000000e+00> : vector<16xf32>
    %14 = vector.multi_reduction <add>, %11, %cst_5 [1] : vector<16x32xf32> to vector<16xf32>
    %15 = vector.shape_cast %14 : vector<16xf32> to vector<16x1xf32>
    %cst_6 = arith.constant 3.200000e+01 : f32
    %16 = vector.broadcast %cst_6 : f32 to vector<16x1xf32>
    %17 = arith.divf %15, %16 : vector<16x1xf32>
    %18 = vector.broadcast %17 : vector<16x1xf32> to vector<16x32xf32>
    %19 = arith.subf %11, %18 : vector<16x32xf32>
    %20 = arith.mulf %19, %19 : vector<16x32xf32>
    %cst_7 = arith.constant dense<0.000000e+00> : vector<16xf32>
    %21 = vector.multi_reduction <add>, %20, %cst_7 [1] : vector<16x32xf32> to vector<16xf32>
    %22 = vector.shape_cast %21 : vector<16xf32> to vector<16x1xf32>
    %cst_8 = arith.constant 3.200000e+01 : f32
    %23 = vector.broadcast %cst_8 : f32 to vector<16x1xf32>
    %24 = arith.divf %22, %23 : vector<16x1xf32>
    %25 = vector.broadcast %17 : vector<16x1xf32> to vector<16x32xf32>
    %26 = arith.subf %11, %25 : vector<16x32xf32>
    %cst_9 = arith.constant 9.99999996E-13 : f32
    %27 = vector.broadcast %cst_9 : f32 to vector<16x1xf32>
    %28 = arith.addf %24, %27 : vector<16x1xf32>
    %29 = math.rsqrt %28 : vector<16x1xf32>
    %30 = vector.broadcast %29 : vector<16x1xf32> to vector<16x32xf32>
    %31 = arith.mulf %26, %30 : vector<16x32xf32>
    %32 = vector.broadcast %12 : vector<1x32xf32> to vector<16x32xf32>
    %33 = arith.mulf %31, %32 : vector<16x32xf32>
    %34 = vector.broadcast %13 : vector<1x32xf32> to vector<16x32xf32>
    %35 = arith.addf %33, %34 : vector<16x32xf32>
    %c0_10 = arith.constant 0 : index
    %c256 = arith.constant 256 : index
    %36 = vector.load %arg1[%c0_10, %c256] : memref<64x1664xf32, #tpu.memory_space<vmem>>, vector<32x32xf32>
    %cst_11 = arith.constant dense<0.000000e+00> : vector<16x32xf32>
    %37 = tpu.matmul %35, %36, %cst_11 {dimension_numbers = #tpu.dot_dimension_numbers<[1], [0], [0], [1], [0, 0, 1, 1], [], []>} : vector<16x32xf32>, vector<32x32xf32>, vector<16x32xf32> -> vector<16x32xf32>
    %38 = vector.extract_strided_slice %0 {offsets = [0, 0], sizes = [1, 32], strides = [1, 1]} : vector<16x128xf32> to vector<1x32xf32>
    %39 = vector.broadcast %38 : vector<1x32xf32> to vector<16x32xf32>
    %40 = arith.addf %37, %39 : vector<16x32xf32>
    %c0_12 = arith.constant 0 : index
    %c384 = arith.constant 384 : index
    %41 = vector.load %arg1[%c0_12, %c384] : memref<64x1664xf32, #tpu.memory_space<vmem>>, vector<32x32xf32>
    %cst_13 = arith.constant dense<0.000000e+00> : vector<16x32xf32>
    %42 = tpu.matmul %35, %41, %cst_13 {dimension_numbers = #tpu.dot_dimension_numbers<[1], [0], [0], [1], [0, 0, 1, 1], [], []>} : vector<16x32xf32>, vector<32x32xf32>, vector<16x32xf32> -> vector<16x32xf32>
    %43 = vector.extract_strided_slice %0 {offsets = [1, 0], sizes = [1, 32], strides = [1, 1]} : vector<16x128xf32> to vector<1x32xf32>
    %44 = vector.broadcast %43 : vector<1x32xf32> to vector<16x32xf32>
    %45 = arith.addf %42, %44 : vector<16x32xf32>
    %46 = vector.extract_strided_slice %40 {offsets = [0, 0], sizes = [16, 8], strides = [1, 1]} : vector<16x32xf32> to vector<16x8xf32>
    %47 = vector.extract_strided_slice %45 {offsets = [0, 0], sizes = [16, 8], strides = [1, 1]} : vector<16x32xf32> to vector<16x8xf32>
    %cst_14 = arith.constant dense<0.000000e+00> : vector<16x16xf32>
    %48 = tpu.matmul %46, %47, %cst_14 {dimension_numbers = #tpu.dot_dimension_numbers<[1], [1], [0], [0], [0, 0, 1, 0], [], []>} : vector<16x8xf32>, vector<16x8xf32>, vector<16x16xf32> -> vector<16x16xf32>
    %49 = vector.extract_strided_slice %40 {offsets = [0, 8], sizes = [16, 8], strides = [1, 1]} : vector<16x32xf32> to vector<16x8xf32>
    %50 = vector.extract_strided_slice %45 {offsets = [0, 8], sizes = [16, 8], strides = [1, 1]} : vector<16x32xf32> to vector<16x8xf32>
    %cst_15 = arith.constant dense<0.000000e+00> : vector<16x16xf32>
    %51 = tpu.matmul %49, %50, %cst_15 {dimension_numbers = #tpu.dot_dimension_numbers<[1], [1], [0], [0], [0, 0, 1, 0], [], []>} : vector<16x8xf32>, vector<16x8xf32>, vector<16x16xf32> -> vector<16x16xf32>
    %52 = vector.extract_strided_slice %40 {offsets = [0, 16], sizes = [16, 8], strides = [1, 1]} : vector<16x32xf32> to vector<16x8xf32>
    %53 = vector.extract_strided_slice %45 {offsets = [0, 16], sizes = [16, 8], strides = [1, 1]} : vector<16x32xf32> to vector<16x8xf32>
    %cst_16 = arith.constant dense<0.000000e+00> : vector<16x16xf32>
    %54 = tpu.matmul %52, %53, %cst_16 {dimension_numbers = #tpu.dot_dimension_numbers<[1], [1], [0], [0], [0, 0, 1, 0], [], []>} : vector<16x8xf32>, vector<16x8xf32>, vector<16x16xf32> -> vector<16x16xf32>
    %55 = vector.extract_strided_slice %40 {offsets = [0, 24], sizes = [16, 8], strides = [1, 1]} : vector<16x32xf32> to vector<16x8xf32>
    %56 = vector.extract_strided_slice %45 {offsets = [0, 24], sizes = [16, 8], strides = [1, 1]} : vector<16x32xf32> to vector<16x8xf32>
    %cst_17 = arith.constant dense<0.000000e+00> : vector<16x16xf32>
    %57 = tpu.matmul %55, %56, %cst_17 {dimension_numbers = #tpu.dot_dimension_numbers<[1], [1], [0], [0], [0, 0, 1, 0], [], []>} : vector<16x8xf32>, vector<16x8xf32>, vector<16x16xf32> -> vector<16x16xf32>
    %58 = tpu.concatenate %48, %51, %54, %57 in 0 : vector<16x16xf32>, vector<16x16xf32>, vector<16x16xf32>, vector<16x16xf32> -> vector<64x16xf32>
    %c0_18 = arith.constant 0 : index
    %c0_19 = arith.constant 0 : index
    %59 = vector.load %arg0[%c0_18, %c0_19] : memref<64x384xf32, #tpu.memory_space<vmem>>, vector<64x16xf32>
    %60 = arith.addf %58, %59 : vector<64x16xf32>
    %cst_20 = arith.constant dense<0xFF800000> : vector<64xf32>
    %61 = vector.multi_reduction <maximumf>, %60, %cst_20 [1] : vector<64x16xf32> to vector<64xf32>
    %62 = vector.shape_cast %61 : vector<64xf32> to vector<64x1xf32>
    %63 = vector.broadcast %62 : vector<64x1xf32> to vector<64x16xf32>
    %64 = arith.subf %60, %63 : vector<64x16xf32>
    %65 = math.exp %64 : vector<64x16xf32>
    %cst_21 = arith.constant dense<0.000000e+00> : vector<64xf32>
    %66 = vector.multi_reduction <add>, %65, %cst_21 [1] : vector<64x16xf32> to vector<64xf32>
    %67 = vector.shape_cast %66 : vector<64xf32> to vector<64x1xf32>
    %68 = tpu.reciprocal %67 {approx = true} : vector<64x1xf32> -> vector<64x1xf32>
    %69 = vector.broadcast %68 : vector<64x1xf32> to vector<64x16xf32>
    %70 = arith.mulf %65, %69 : vector<64x16xf32>
    %c0_22 = arith.constant 0 : index
    %c512 = arith.constant 512 : index
    %71 = vector.load %arg1[%c0_22, %c512] : memref<64x1664xf32, #tpu.memory_space<vmem>>, vector<32x32xf32>
    %cst_23 = arith.constant dense<0.000000e+00> : vector<16x32xf32>
    %72 = tpu.matmul %35, %71, %cst_23 {dimension_numbers = #tpu.dot_dimension_numbers<[1], [0], [0], [1], [0, 0, 1, 1], [], []>} : vector<16x32xf32>, vector<32x32xf32>, vector<16x32xf32> -> vector<16x32xf32>
    %73 = vector.extract_strided_slice %70 {offsets = [0, 0], sizes = [16, 16], strides = [1, 1]} : vector<64x16xf32> to vector<16x16xf32>
    %cst_24 = arith.constant dense<0.000000e+00> : vector<16x32xf32>
    %74 = tpu.matmul %73, %72, %cst_24 {dimension_numbers = #tpu.dot_dimension_numbers<[1], [0], [0], [1], [0, 0, 1, 1], [], []>} : vector<16x16xf32>, vector<16x32xf32>, vector<16x32xf32> -> vector<16x32xf32>
    %c0_25 = arith.constant 0 : index
    %c640 = arith.constant 640 : index
    %75 = vector.load %arg1[%c0_25, %c640] : memref<64x1664xf32, #tpu.memory_space<vmem>>, vector<32x32xf32>
    %cst_26 = arith.constant dense<0.000000e+00> : vector<16x32xf32>
    %76 = tpu.matmul %35, %75, %cst_26 {dimension_numbers = #tpu.dot_dimension_numbers<[1], [0], [0], [1], [0, 0, 1, 1], [], []>} : vector<16x32xf32>, vector<32x32xf32>, vector<16x32xf32> -> vector<16x32xf32>
    %77 = vector.extract_strided_slice %70 {offsets = [16, 0], sizes = [16, 16], strides = [1, 1]} : vector<64x16xf32> to vector<16x16xf32>
    %cst_27 = arith.constant dense<0.000000e+00> : vector<16x32xf32>
    %78 = tpu.matmul %77, %76, %cst_27 {dimension_numbers = #tpu.dot_dimension_numbers<[1], [0], [0], [1], [0, 0, 1, 1], [], []>} : vector<16x16xf32>, vector<16x32xf32>, vector<16x32xf32> -> vector<16x32xf32>
    %79 = arith.addf %74, %78 : vector<16x32xf32>
    %c0_28 = arith.constant 0 : index
    %c768 = arith.constant 768 : index
    %80 = vector.load %arg1[%c0_28, %c768] : memref<64x1664xf32, #tpu.memory_space<vmem>>, vector<32x32xf32>
    %cst_29 = arith.constant dense<0.000000e+00> : vector<16x32xf32>
    %81 = tpu.matmul %35, %80, %cst_29 {dimension_numbers = #tpu.dot_dimension_numbers<[1], [0], [0], [1], [0, 0, 1, 1], [], []>} : vector<16x32xf32>, vector<32x32xf32>, vector<16x32xf32> -> vector<16x32xf32>
    %82 = vector.extract_strided_slice %70 {offsets = [32, 0], sizes = [16, 16], strides = [1, 1]} : vector<64x16xf32> to vector<16x16xf32>
    %cst_30 = arith.constant dense<0.000000e+00> : vector<16x32xf32>
    %83 = tpu.matmul %82, %81, %cst_30 {dimension_numbers = #tpu.dot_dimension_numbers<[1], [0], [0], [1], [0, 0, 1, 1], [], []>} : vector<16x16xf32>, vector<16x32xf32>, vector<16x32xf32> -> vector<16x32xf32>
    %84 = arith.addf %79, %83 : vector<16x32xf32>
    %c0_31 = arith.constant 0 : index
    %c896 = arith.constant 896 : index
    %85 = vector.load %arg1[%c0_31, %c896] : memref<64x1664xf32, #tpu.memory_space<vmem>>, vector<32x32xf32>
    %cst_32 = arith.constant dense<0.000000e+00> : vector<16x32xf32>
    %86 = tpu.matmul %35, %85, %cst_32 {dimension_numbers = #tpu.dot_dimension_numbers<[1], [0], [0], [1], [0, 0, 1, 1], [], []>} : vector<16x32xf32>, vector<32x32xf32>, vector<16x32xf32> -> vector<16x32xf32>
    %87 = vector.extract_strided_slice %70 {offsets = [48, 0], sizes = [16, 16], strides = [1, 1]} : vector<64x16xf32> to vector<16x16xf32>
    %cst_33 = arith.constant dense<0.000000e+00> : vector<16x32xf32>
    %88 = tpu.matmul %87, %86, %cst_33 {dimension_numbers = #tpu.dot_dimension_numbers<[1], [0], [0], [1], [0, 0, 1, 1], [], []>} : vector<16x16xf32>, vector<16x32xf32>, vector<16x32xf32> -> vector<16x32xf32>
    %89 = arith.addf %84, %88 : vector<16x32xf32>
    %90 = vector.extract_strided_slice %0 {offsets = [2, 0], sizes = [1, 32], strides = [1, 1]} : vector<16x128xf32> to vector<1x32xf32>
    %91 = vector.broadcast %90 : vector<1x32xf32> to vector<16x32xf32>
    %92 = arith.addf %89, %91 : vector<16x32xf32>
    %93 = arith.addf %35, %92 : vector<16x32xf32>
    %94 = vector.extract_strided_slice %0 {offsets = [7, 0], sizes = [1, 32], strides = [1, 1]} : vector<16x128xf32> to vector<1x32xf32>
    %95 = vector.extract_strided_slice %0 {offsets = [8, 0], sizes = [1, 32], strides = [1, 1]} : vector<16x128xf32> to vector<1x32xf32>
    %cst_34 = arith.constant dense<0.000000e+00> : vector<16xf32>
    %96 = vector.multi_reduction <add>, %93, %cst_34 [1] : vector<16x32xf32> to vector<16xf32>
    %97 = vector.shape_cast %96 : vector<16xf32> to vector<16x1xf32>
    %cst_35 = arith.constant 3.200000e+01 : f32
    %98 = vector.broadcast %cst_35 : f32 to vector<16x1xf32>
    %99 = arith.divf %97, %98 : vector<16x1xf32>
    %100 = vector.broadcast %99 : vector<16x1xf32> to vector<16x32xf32>
    %101 = arith.subf %93, %100 : vector<16x32xf32>
    %102 = arith.mulf %101, %101 : vector<16x32xf32>
    %cst_36 = arith.constant dense<0.000000e+00> : vector<16xf32>
    %103 = vector.multi_reduction <add>, %102, %cst_36 [1] : vector<16x32xf32> to vector<16xf32>
    %104 = vector.shape_cast %103 : vector<16xf32> to vector<16x1xf32>
    %cst_37 = arith.constant 3.200000e+01 : f32
    %105 = vector.broadcast %cst_37 : f32 to vector<16x1xf32>
    %106 = arith.divf %104, %105 : vector<16x1xf32>
    %107 = vector.broadcast %99 : vector<16x1xf32> to vector<16x32xf32>
    %108 = arith.subf %93, %107 : vector<16x32xf32>
    %cst_38 = arith.constant 9.99999996E-13 : f32
    %109 = vector.broadcast %cst_38 : f32 to vector<16x1xf32>
    %110 = arith.addf %106, %109 : vector<16x1xf32>
    %111 = math.rsqrt %110 : vector<16x1xf32>
    %112 = vector.broadcast %111 : vector<16x1xf32> to vector<16x32xf32>
    %113 = arith.mulf %108, %112 : vector<16x32xf32>
    %114 = vector.broadcast %94 : vector<1x32xf32> to vector<16x32xf32>
    %115 = arith.mulf %113, %114 : vector<16x32xf32>
    %116 = vector.broadcast %95 : vector<1x32xf32> to vector<16x32xf32>
    %117 = arith.addf %115, %116 : vector<16x32xf32>
    %c0_39 = arith.constant 0 : index
    %c1024 = arith.constant 1024 : index
    %118 = vector.load %arg1[%c0_39, %c1024] : memref<64x1664xf32, #tpu.memory_space<vmem>>, vector<32x64xf32>
    %cst_40 = arith.constant dense<0.000000e+00> : vector<16x64xf32>
    %119 = tpu.matmul %117, %118, %cst_40 {dimension_numbers = #tpu.dot_dimension_numbers<[1], [0], [0], [1], [0, 0, 1, 1], [], []>} : vector<16x32xf32>, vector<32x64xf32>, vector<16x64xf32> -> vector<16x64xf32>
    %120 = vector.extract_strided_slice %0 {offsets = [3, 0], sizes = [1, 64], strides = [1, 1]} : vector<16x128xf32> to vector<1x64xf32>
    %121 = vector.broadcast %120 : vector<1x64xf32> to vector<16x64xf32>
    %122 = arith.addf %119, %121 : vector<16x64xf32>
    %cst_41 = arith.constant 5.000000e-01 : f32
    %123 = vector.broadcast %cst_41 : f32 to vector<16x64xf32>
    %124 = arith.mulf %123, %122 : vector<16x64xf32>
    %cst_42 = arith.constant 4.471500e-02 : f32
    %125 = vector.broadcast %cst_42 : f32 to vector<16x64xf32>
    %126 = arith.mulf %125, %122 : vector<16x64xf32>
    %127 = arith.mulf %126, %122 : vector<16x64xf32>
    %128 = arith.mulf %127, %122 : vector<16x64xf32>
    %129 = arith.addf %122, %128 : vector<16x64xf32>
    %cst_43 = arith.constant 0.797884583 : f32
    %130 = vector.broadcast %cst_43 : f32 to vector<16x64xf32>
    %131 = arith.mulf %130, %129 : vector<16x64xf32>
    %132 = math.tanh %131 : vector<16x64xf32>
    %cst_44 = arith.constant 1.000000e+00 : f32
    %133 = vector.broadcast %cst_44 : f32 to vector<16x64xf32>
    %134 = arith.addf %133, %132 : vector<16x64xf32>
    %135 = arith.mulf %124, %134 : vector<16x64xf32>
    %c0_45 = arith.constant 0 : index
    %c1152 = arith.constant 1152 : index
    %136 = vector.load %arg1[%c0_45, %c1152] : memref<64x1664xf32, #tpu.memory_space<vmem>>, vector<64x32xf32>
    %cst_46 = arith.constant dense<0.000000e+00> : vector<16x32xf32>
    %137 = tpu.matmul %135, %136, %cst_46 {dimension_numbers = #tpu.dot_dimension_numbers<[1], [0], [0], [1], [0, 0, 1, 1], [], []>} : vector<16x64xf32>, vector<64x32xf32>, vector<16x32xf32> -> vector<16x32xf32>
    %138 = vector.extract_strided_slice %0 {offsets = [4, 0], sizes = [1, 32], strides = [1, 1]} : vector<16x128xf32> to vector<1x32xf32>
    %139 = vector.broadcast %138 : vector<1x32xf32> to vector<16x32xf32>
    %140 = arith.addf %137, %139 : vector<16x32xf32>
    %141 = arith.addf %117, %140 : vector<16x32xf32>
    %142 = vector.extract_strided_slice %0 {offsets = [9, 0], sizes = [1, 32], strides = [1, 1]} : vector<16x128xf32> to vector<1x32xf32>
    %143 = vector.extract_strided_slice %0 {offsets = [10, 0], sizes = [1, 32], strides = [1, 1]} : vector<16x128xf32> to vector<1x32xf32>
    %cst_47 = arith.constant dense<0.000000e+00> : vector<16xf32>
    %144 = vector.multi_reduction <add>, %141, %cst_47 [1] : vector<16x32xf32> to vector<16xf32>
    %145 = vector.shape_cast %144 : vector<16xf32> to vector<16x1xf32>
    %cst_48 = arith.constant 3.200000e+01 : f32
    %146 = vector.broadcast %cst_48 : f32 to vector<16x1xf32>
    %147 = arith.divf %145, %146 : vector<16x1xf32>
    %148 = vector.broadcast %147 : vector<16x1xf32> to vector<16x32xf32>
    %149 = arith.subf %141, %148 : vector<16x32xf32>
    %150 = arith.mulf %149, %149 : vector<16x32xf32>
    %cst_49 = arith.constant dense<0.000000e+00> : vector<16xf32>
    %151 = vector.multi_reduction <add>, %150, %cst_49 [1] : vector<16x32xf32> to vector<16xf32>
    %152 = vector.shape_cast %151 : vector<16xf32> to vector<16x1xf32>
    %cst_50 = arith.constant 3.200000e+01 : f32
    %153 = vector.broadcast %cst_50 : f32 to vector<16x1xf32>
    %154 = arith.divf %152, %153 : vector<16x1xf32>
    %155 = vector.broadcast %147 : vector<16x1xf32> to vector<16x32xf32>
    %156 = arith.subf %141, %155 : vector<16x32xf32>
    %cst_51 = arith.constant 9.99999996E-13 : f32
    %157 = vector.broadcast %cst_51 : f32 to vector<16x1xf32>
    %158 = arith.addf %154, %157 : vector<16x1xf32>
    %159 = math.rsqrt %158 : vector<16x1xf32>
    %160 = vector.broadcast %159 : vector<16x1xf32> to vector<16x32xf32>
    %161 = arith.mulf %156, %160 : vector<16x32xf32>
    %162 = vector.broadcast %142 : vector<1x32xf32> to vector<16x32xf32>
    %163 = arith.mulf %161, %162 : vector<16x32xf32>
    %164 = vector.broadcast %143 : vector<1x32xf32> to vector<16x32xf32>
    %165 = arith.addf %163, %164 : vector<16x32xf32>
    %166 = vector.extract_strided_slice %165 {offsets = [0, 0], sizes = [1, 32], strides = [1, 1]} : vector<16x32xf32> to vector<1x32xf32>
    %167 = vector.extract_strided_slice %165 {offsets = [8, 0], sizes = [1, 32], strides = [1, 1]} : vector<16x32xf32> to vector<1x32xf32>
    %168 = tpu.concatenate %166, %167 in 0 : vector<1x32xf32>, vector<1x32xf32> -> vector<2x32xf32>
    %c0_52 = arith.constant 0 : index
    %c1280 = arith.constant 1280 : index
    %169 = vector.load %arg1[%c0_52, %c1280] : memref<64x1664xf32, #tpu.memory_space<vmem>>, vector<32x40xf32>
    %cst_53 = arith.constant dense<0.000000e+00> : vector<2x40xf32>
    %170 = tpu.matmul %168, %169, %cst_53 {dimension_numbers = #tpu.dot_dimension_numbers<[1], [0], [0], [1], [0, 0, 1, 1], [], []>} : vector<2x32xf32>, vector<32x40xf32>, vector<2x40xf32> -> vector<2x40xf32>
    %171 = vector.extract_strided_slice %0 {offsets = [11, 0], sizes = [1, 40], strides = [1, 1]} : vector<16x128xf32> to vector<1x40xf32>
    %172 = vector.broadcast %171 : vector<1x40xf32> to vector<2x40xf32>
    %173 = arith.addf %170, %172 : vector<2x40xf32>
    %cst_54 = arith.constant 5.000000e-01 : f32
    %174 = vector.broadcast %cst_54 : f32 to vector<2x40xf32>
    %175 = arith.mulf %174, %173 : vector<2x40xf32>
    %cst_55 = arith.constant 4.471500e-02 : f32
    %176 = vector.broadcast %cst_55 : f32 to vector<2x40xf32>
    %177 = arith.mulf %176, %173 : vector<2x40xf32>
    %178 = arith.mulf %177, %173 : vector<2x40xf32>
    %179 = arith.mulf %178, %173 : vector<2x40xf32>
    %180 = arith.addf %173, %179 : vector<2x40xf32>
    %cst_56 = arith.constant 0.797884583 : f32
    %181 = vector.broadcast %cst_56 : f32 to vector<2x40xf32>
    %182 = arith.mulf %181, %180 : vector<2x40xf32>
    %183 = math.tanh %182 : vector<2x40xf32>
    %cst_57 = arith.constant 1.000000e+00 : f32
    %184 = vector.broadcast %cst_57 : f32 to vector<2x40xf32>
    %185 = arith.addf %184, %183 : vector<2x40xf32>
    %186 = arith.mulf %175, %185 : vector<2x40xf32>
    %c0_58 = arith.constant 0 : index
    %c1408 = arith.constant 1408 : index
    %187 = vector.load %arg1[%c0_58, %c1408] : memref<64x1664xf32, #tpu.memory_space<vmem>>, vector<40x5xf32>
    %cst_59 = arith.constant dense<0.000000e+00> : vector<2x5xf32>
    %188 = tpu.matmul %186, %187, %cst_59 {dimension_numbers = #tpu.dot_dimension_numbers<[1], [0], [0], [1], [0, 0, 1, 1], [], []>} : vector<2x40xf32>, vector<40x5xf32>, vector<2x5xf32> -> vector<2x5xf32>
    %189 = vector.extract_strided_slice %0 {offsets = [12, 0], sizes = [1, 5], strides = [1, 1]} : vector<16x128xf32> to vector<1x5xf32>
    %190 = vector.broadcast %189 : vector<1x5xf32> to vector<2x5xf32>
    %191 = arith.addf %188, %190 : vector<2x5xf32>
    %c0_60 = arith.constant 0 : index
    %c256_61 = arith.constant 256 : index
    %192 = vector.load %arg0[%c0_60, %c256_61] : memref<64x384xf32, #tpu.memory_space<vmem>>, vector<2x5xf32>
    %cst_62 = arith.constant 0.000000e+00 : f32
    %193 = vector.broadcast %cst_62 : f32 to vector<2x5xf32>
    %194 = arith.cmpf oge, %192, %193 : vector<2x5xf32>
    %195 = arith.extui %194 : vector<2x5xi1> to vector<2x5xi32>
    %196 = arith.sitofp %195 : vector<2x5xi32> to vector<2x5xf32>
    %197 = tpu.iota {dimensions = array<i32: 0>} : vector<5x5xi32>
    %198 = tpu.iota {dimensions = array<i32: 1>} : vector<5x5xi32>
    %199 = arith.cmpi sle, %197, %198 : vector<5x5xi32>
    %200 = arith.extui %199 : vector<5x5xi1> to vector<5x5xi32>
    %201 = arith.sitofp %200 : vector<5x5xi32> to vector<5x5xf32>
    %cst_63 = arith.constant dense<0.000000e+00> : vector<2x5xf32>
    %202 = tpu.matmul %196, %201, %cst_63 {dimension_numbers = #tpu.dot_dimension_numbers<[1], [0], [0], [1], [0, 0, 1, 1], [], []>} : vector<2x5xf32>, vector<5x5xf32>, vector<2x5xf32> -> vector<2x5xf32>
    %203 = tpu.iota {dimensions = array<i32: 1>} : vector<2x5xi32>
    %204 = arith.sitofp %203 : vector<2x5xi32> to vector<2x5xf32>
    %cst_64 = arith.constant 5.000000e-01 : f32
    %205 = vector.broadcast %cst_64 : f32 to vector<2x5xf32>
    %206 = arith.addf %204, %205 : vector<2x5xf32>
    %207 = arith.cmpf ogt, %202, %206 : vector<2x5xf32>
    %208 = arith.extui %207 : vector<2x5xi1> to vector<2x5xi32>
    %209 = arith.sitofp %208 : vector<2x5xi32> to vector<2x5xf32>
    %210 = vector.shape_cast %192 : vector<2x5xf32> to vector<2x5x1xf32>
    %211 = vector.shape_cast %204 : vector<2x5xf32> to vector<2x1x5xf32>
    %212 = vector.broadcast %210 : vector<2x5x1xf32> to vector<2x5x5xf32>
    %213 = vector.broadcast %211 : vector<2x1x5xf32> to vector<2x5x5xf32>
    %214 = arith.cmpf oeq, %212, %213 : vector<2x5x5xf32>
    %215 = arith.extui %214 : vector<2x5x5xi1> to vector<2x5x5xi32>
    %216 = arith.sitofp %215 : vector<2x5x5xi32> to vector<2x5x5xf32>
    %217 = vector.shape_cast %209 : vector<2x5xf32> to vector<2x5x1xf32>
    %218 = vector.broadcast %217 : vector<2x5x1xf32> to vector<2x5x5xf32>
    %219 = arith.mulf %216, %218 : vector<2x5x5xf32>
    %cst_65 = arith.constant dense<0.000000e+00> : vector<2x5xf32>
    %220 = vector.multi_reduction <add>, %219, %cst_65 [1] : vector<2x5x5xf32> to vector<2x5xf32>
    %cst_66 = arith.constant 5.000000e-01 : f32
    %221 = vector.broadcast %cst_66 : f32 to vector<2x5xf32>
    %222 = arith.cmpf olt, %220, %221 : vector<2x5xf32>
    %223 = arith.extui %222 : vector<2x5xi1> to vector<2x5xi32>
    %224 = arith.sitofp %223 : vector<2x5xi32> to vector<2x5xf32>
    %225 = vector.shape_cast %191 : vector<2x5xf32> to vector<2x1x5xf32>
    %226 = vector.broadcast %225 : vector<2x1x5xf32> to vector<2x5x5xf32>
    %227 = arith.mulf %216, %226 : vector<2x5x5xf32>
    %cst_67 = arith.constant dense<0.000000e+00> : vector<2x5xf32>
    %228 = vector.multi_reduction <add>, %227, %cst_67 [2] : vector<2x5x5xf32> to vector<2x5xf32>
    %229 = vector.shape_cast %228 : vector<2x5xf32> to vector<2x5x1xf32>
    %cst_68 = arith.constant 1.000000e+00 : f32
    %230 = vector.broadcast %cst_68 : f32 to vector<2x5x1xf32>
    %231 = arith.subf %230, %229 : vector<2x5x1xf32>
    %232 = vector.shape_cast %191 : vector<2x5xf32> to vector<2x1x5xf32>
    %233 = vector.broadcast %231 : vector<2x5x1xf32> to vector<2x5x5xf32>
    %234 = vector.broadcast %232 : vector<2x1x5xf32> to vector<2x5x5xf32>
    %235 = arith.addf %233, %234 : vector<2x5x5xf32>
    %cst_69 = arith.constant 0.000000e+00 : f32
    %236 = vector.broadcast %cst_69 : f32 to vector<2x5x5xf32>
    %237 = arith.maximumf %236, %235 : vector<2x5x5xf32>
    %238 = vector.shape_cast %209 : vector<2x5xf32> to vector<2x5x1xf32>
    %239 = vector.shape_cast %224 : vector<2x5xf32> to vector<2x1x5xf32>
    %240 = vector.broadcast %238 : vector<2x5x1xf32> to vector<2x5x5xf32>
    %241 = vector.broadcast %239 : vector<2x1x5xf32> to vector<2x5x5xf32>
    %242 = arith.mulf %240, %241 : vector<2x5x5xf32>
    %243 = arith.mulf %237, %242 : vector<2x5x5xf32>
    %cst_70 = arith.constant dense<0.000000e+00> : vector<2x5xf32>
    %244 = vector.multi_reduction <add>, %243, %cst_70 [2] : vector<2x5x5xf32> to vector<2x5xf32>
    %cst_71 = arith.constant dense<0.000000e+00> : vector<2xf32>
    %245 = vector.multi_reduction <add>, %244, %cst_71 [1] : vector<2x5xf32> to vector<2xf32>
    %246 = vector.shape_cast %245 : vector<2xf32> to vector<2x1xf32>
    %cst_72 = arith.constant dense<0.000000e+00> : vector<1xf32>
    %247 = vector.multi_reduction <add>, %246, %cst_72 [0] : vector<2x1xf32> to vector<1xf32>
    %248 = vector.shape_cast %247 : vector<1xf32> to vector<1x1xf32>
    %cst_73 = arith.constant 1.000000e-01 : f32
    %249 = vector.broadcast %cst_73 : f32 to vector<1x1xf32>
    %250 = arith.mulf %248, %249 : vector<1x1xf32>
    %cst_74 = arith.constant 0.000000e+00 : f32
    %251 = vector.broadcast %cst_74 : f32 to vector<2x123xf32>
    %252 = tpu.concatenate %191, %251 in 1 : vector<2x5xf32>, vector<2x123xf32> -> vector<2x128xf32>
    %cst_75 = arith.constant 0.000000e+00 : f32
    %253 = vector.broadcast %cst_75 : f32 to vector<1x127xf32>
    %254 = tpu.concatenate %250, %253 in 1 : vector<1x1xf32>, vector<1x127xf32> -> vector<1x128xf32>
    %cst_76 = arith.constant 0.000000e+00 : f32
    %255 = vector.broadcast %cst_76 : f32 to vector<5x128xf32>
    %256 = tpu.concatenate %252, %254, %255 in 0 : vector<2x128xf32>, vector<1x128xf32>, vector<5x128xf32> -> vector<8x128xf32>
    %c0_77 = arith.constant 0 : index
    %c0_78 = arith.constant 0 : index
    %257 = vector.load %arg2[%c0_77, %c0_78] : memref<8x128xf32, #tpu.memory_space<vmem>>, vector<8x128xf32>
    tpu.vector_store %arg2[%c0_77, %c0_78], %256 {strides = array<i32>} : memref<8x128xf32, #tpu.memory_space<vmem>>, vector<8x128xf32>,
    return
  }
}

</mosaic_0001>

<llo_original>
// kernel: transformer_model_pairwise_forward.1
$region0: #{transformer_model_pairwise_forward.1}
  #allocation0 [shape = 'u32[]', space=smem, size = 0x4, offset = 0x4, fixed_abs, tag = 'smem constant byte address 0x4 - core index']
  #allocation1 [shape = 'u32[72,128]{1,0:T(1,128)}', space=vmem, size = 0x9000, scoped, tag = 'internal scratch']
  %s0 = inlined_call_operand.vmem [shape: f32[64,384], index: 0, kind: input, shape index: {}]
  %s1 = inlined_call_operand.hbm [shape: f32[64,1664], index: 1, kind: input, shape index: {}]
  %s2 = inlined_call_operand.vmem [shape: f32[8,128], index: 2, kind: output, shape index: {}]
  %s3 = sld [smem:[#allocation0]]
  $region22: #{transformer_model_pairwise_forward.1} parent=0
    _
  %s5 = ssub.s32 1, %s3
  %s6 = scalar_select 0, %s5, %s3
  $region1: #{transformer_model_pairwise_forward.1} parent=0
    #allocation2 [shape = 'u8[425984]{0}', space=vmem, size = 0x68000, scoped, tag = 'input window, operand 1, single buffered']
    #allocation3 [shape = 's32[1]{0}', space=sflag, size = 0x4, scoped, tag = 'scoped memory for transformer_model_pairwise_forward.1']
    %7 = vsyncpa [#allocation3], 0
    // Predicated region
    $region2: #{transformer_model_pairwise_forward.1} parent=1 // pred_check
      _
    $region3: #{transformer_model_pairwise_forward.1} parent=1 // pred_check_branch
      %9 = sbr.rel (0) target = $region5
    $region4: #{transformer_model_pairwise_forward.1} parent=1 // pred_region
      _
    $region5: #{transformer_model_pairwise_forward.1} parent=1 // pred_fallthru
      _
    // Predicated region
    $region6: #{transformer_model_pairwise_forward.1} parent=1 // pred_check
      _
    $region7: #{transformer_model_pairwise_forward.1} parent=1 // pred_check_branch
      %11 = sbr.rel (0) target = $region9
    $region8: #{transformer_model_pairwise_forward.1} parent=1 // pred_region
      %13 = vsyncadd [#allocation3], 0
      %s14 = sshll.u32 %s1, 4
      %s15 = int_to_ptr.hbm [resolvable:$true] %s14
      %s16 = sshll.u32 [#allocation2], 4
      %s17 = int_to_ptr.vmem [resolvable:$true] %s16
      %22 = dma.hbm_to_vmem [thread:$0]  %s15, 13312, %s17, [#allocation3], 1664, 1664, 104
    $region9: #{transformer_model_pairwise_forward.1} parent=1 // pred_fallthru
      _
    // Predicated region
    $region10: #{transformer_model_pairwise_forward.1} parent=1 // pred_check
      _
    $region11: #{transformer_model_pairwise_forward.1} parent=1 // pred_check_branch
      %24 = sbr.rel (0) target = $region13
    $region12: #{transformer_model_pairwise_forward.1} parent=1 // pred_region
      %26 = dma.done [#allocation3], 13312
    $region13: #{transformer_model_pairwise_forward.1} parent=1 // pred_fallthru
      _
    %v27 = vld [vmem:[#allocation2 + $0x60] sm:$0xff]
    %v28 = vld [vmem:[#allocation2 + $0xc8] sm:$0xff]
    %v29 = vld [vmem:[%s0 + $0x8] sm:$0xff]
    %v30 = vld [vmem:[%s0 + $0x20] sm:$0xff]
    %v31 = vlaneseq
    %v32 = vand.u32 %v31, 127
    %v33 = vcvt.s32.f32 %v32
    %35 = vset.pattern.permute.xlu0 0
    %36 = vperm.xlu0 %35, %v29
    %v37 = vpop.permute.xlu0 %36
    %40 = vset.pattern.permute.xlu0 0
    %41 = vperm.xlu0 %40, %v30
    %v42 = vpop.permute.xlu0 %41
    %vm44 = vcmp.eq.f32.partialorder %v37, %v33
    %vm45 = vcmp.eq.f32.partialorder %v42, %v33
    %v46 = vsel %vm44, 1, 0
    %v47 = vsel %vm45, 1, 0
    %v48 = vcvt.s32.f32 %v46
    %v49 = vcvt.s32.f32 %v47
    %v50 = vld [vmem:[#allocation2] sm:$0xff]
    %v51 = vld [vmem:[#allocation2 + $0x68] sm:$0xff]
    %v52 = vld [vmem:[#allocation2 + $0xd0] sm:$0xff]
    %v53 = vld [vmem:[#allocation2 + $0x138] sm:$0xff]
    %v54 = vld [vmem:[#allocation2 + $0x1a0] sm:$0xff]
    %v55 = vld [vmem:[#allocation2 + $0x208] sm:$0xff]
    %v56 = vld [vmem:[#allocation2 + $0x270] sm:$0xff]
    %v57 = vld [vmem:[#allocation2 + $0x2d8] sm:$0xff]
    %v58 = vld [vmem:[#allocation2 + $0x8] sm:$0xff]
    %v59 = vld [vmem:[#allocation2 + $0x70] sm:$0xff]
    %vm60 = vcmask 523264
    %v62 = vsel %vm60, %v48, 0
    %v65 = vsel %vm60, %v49, 0
    %67 = vmatpush.msra.mxu0 0.0
    %68 = vmatpush.msra.mxu0 0.0
    %69 = vmatpush.msra.mxu0 0.0
    %70 = vmatpush.msra.mxu0 0.0
    %71 = vmatpush.msra.mxu0 0.0
    %72 = vmatpush.msra.mxu0 0.0
    %73 = vmatpush.msra.mxu0 0.0
    %74 = vmatpush.msra.mxu0 0.0
    %75 = vmatpush.msra.mxu0 %v57
    %76 = vmatpush.msra.mxu0 %v56
    %77 = vmatpush.msra.mxu0 %v55
    %78 = vmatpush.msra.mxu0 %v54
    %79 = vmatpush.msra.mxu0 %v53
    %80 = vmatpush.msra.mxu0 %v52
    %81 = vmatpush.msra.mxu0 %v51
    %82 = vmatpush.msra.mxu0 %v50
    %83 = vmatmul.f32.gmra.mxu0 %v62
    %v84 = vpop.f32.mrf.mxu0
    %v85 = vadd.f32 %v58, %v84
    %86 = vmatmul.f32.gmra.mxu0 %v65
    %v87 = vpop.f32.mrf.mxu0
    %v88 = vadd.f32 %v59, %v87
    %89 = vdwg.mxu0
    %vm90 = vcmask 261120
    %v91 = vsel %vm90, %v85, 0.0
    %92 = vadd.xlane.f32.xlu0 %v91
    %v93 = vpop.xlane.xlu0 %92
    %v94 = vsel %vm90, %v88, 0.0
    %95 = vadd.xlane.f32.xlu0 %v94
    %v96 = vpop.xlane.xlu0 %95
    %v97 = vrcp.pop 32.0
    %v98 = vmul.f32 32.0, %v97
    %v99 = vsub.f32 1.0, %v98
    %v100 = vmul.f32 %v97, %v99
    %v101 = vadd.f32 %v97, %v100
    %vm102 = vweird.f32 %v97
    %v103 = vsel %vm102, %v97, %v101
    %v104 = vmul.f32 %v93, %v103
    %v105 = vmul.f32 %v96, %v103
    %v106 = vsub.f32 %v85, %v104
    %v107 = vsub.f32 %v88, %v105
    %v108 = vmul.f32 %v106, %v106
    %v109 = vmul.f32 %v107, %v107
    %v110 = vsel %vm90, %v108, 0.0
    %111 = vadd.xlane.f32.xlu0 %v110
    %v112 = vpop.xlane.xlu0 %111
    %v113 = vsel %vm90, %v109, 0.0
    %114 = vadd.xlane.f32.xlu0 %v113
    %v115 = vpop.xlane.xlu0 %114
    %v116 = vmul.f32 %v112, %v103
    %v117 = vmul.f32 %v115, %v103
    %v118 = vadd.f32 %v116, 1e-12
    %v119 = vadd.f32 %v117, 1e-12
    %v120 = vrsqrt.pop %v118
    %v121 = vmul.f32 %v120, %v118
    %v122 = vmul.f32 %v121, %v120
    %v123 = vmul.f32 0.5, %v122
    %v124 = vsub.f32 1.5, %v123
    %v125 = vmul.f32 %v120, %v124
    %vm126 = vweird.f32 %v118
    %vm127 = vweird.f32 %v120
    %vm128 = vmor %vm126, %vm127
    %v129 = vsel %vm128, %v120, %v125
    %v130 = vrsqrt.pop %v119
    %v131 = vmul.f32 %v130, %v119
    %v132 = vmul.f32 %v131, %v130
    %v133 = vmul.f32 0.5, %v132
    %v134 = vsub.f32 1.5, %v133
    %v135 = vmul.f32 %v130, %v134
    %vm136 = vweird.f32 %v119
    %vm137 = vweird.f32 %v130
    %vm138 = vmor %vm136, %vm137
    %v139 = vsel %vm138, %v130, %v135
    %v140 = vmul.f32 %v106, %v129
    %v141 = vmul.f32 %v107, %v139
    %v142 = vperm.slane %v27, 5
    %v143 = vmul.f32 %v140, %v142
    %v144 = vmul.f32 %v141, %v142
    %v145 = vperm.slane %v27, 6
    %v146 = vadd.f32 %v143, %v145
    %v147 = vadd.f32 %v144, %v145
    %v148 = vld [vmem:[#allocation2 + $0x10] sm:$0xff]
    %v149 = vld [vmem:[#allocation2 + $0x78] sm:$0xff]
    %v150 = vld [vmem:[#allocation2 + $0xe0] sm:$0xff]
    %v151 = vld [vmem:[#allocation2 + $0x148] sm:$0xff]
    %v152 = vperm.slane %v27, 0
    %v154 = vsel %vm90, %v146, 0
    %v157 = vsel %vm90, %v147, 0
    %159 = vmatpush.msra.mxu0 0.0
    %160 = vmatpush.msra.mxu0 0.0
    %161 = vmatpush.msra.mxu0 0.0
    %162 = vmatpush.msra.mxu0 0.0
    %163 = vmatpush.msra.mxu0 0.0
    %164 = vmatpush.msra.mxu0 0.0
    %165 = vmatpush.msra.mxu0 0.0
    %166 = vmatpush.msra.mxu0 0.0
    %167 = vmatpush.msra.mxu0 0.0
    %168 = vmatpush.msra.mxu0 0.0
    %169 = vmatpush.msra.mxu0 0.0
    %170 = vmatpush.msra.mxu0 0.0
    %171 = vmatpush.msra.mxu0 %v151
    %172 = vmatpush.msra.mxu0 %v150
    %173 = vmatpush.msra.mxu0 %v149
    %174 = vmatpush.msra.mxu0 %v148
    %175 = vmatmul.f32.gmra.mxu0 %v154
    %v176 = vpop.f32.mrf.mxu0
    %v177 = vadd.f32 %v152, %v176
    %178 = vmatmul.f32.gmra.mxu0 %v157
    %v179 = vpop.f32.mrf.mxu0
    %v180 = vadd.f32 %v152, %v179
    %181 = vdwg.mxu0
    %v182 = vld [vmem:[#allocation2 + $0x18] sm:$0xff]
    %v183 = vld [vmem:[#allocation2 + $0x80] sm:$0xff]
    %v184 = vld [vmem:[#allocation2 + $0xe8] sm:$0xff]
    %v185 = vld [vmem:[#allocation2 + $0x150] sm:$0xff]
    %v186 = vperm.slane %v27, 1
    %187 = vmatpush.msra.mxu0 0.0
    %188 = vmatpush.msra.mxu0 0.0
    %189 = vmatpush.msra.mxu0 0.0
    %190 = vmatpush.msra.mxu0 0.0
    %191 = vmatpush.msra.mxu0 0.0
    %192 = vmatpush.msra.mxu0 0.0
    %193 = vmatpush.msra.mxu0 0.0
    %194 = vmatpush.msra.mxu0 0.0
    %195 = vmatpush.msra.mxu0 0.0
    %196 = vmatpush.msra.mxu0 0.0
    %197 = vmatpush.msra.mxu0 0.0
    %198 = vmatpush.msra.mxu0 0.0
    %199 = vmatpush.msra.mxu0 %v185
    %200 = vmatpush.msra.mxu0 %v184
    %201 = vmatpush.msra.mxu0 %v183
    %202 = vmatpush.msra.mxu0 %v182
    %203 = vmatmul.f32.gmra.mxu0 %v154
    %v204 = vpop.f32.mrf.mxu0
    %v205 = vadd.f32 %v186, %v204
    %206 = vmatmul.f32.gmra.mxu0 %v157
    %v207 = vpop.f32.mrf.mxu0
    %v208 = vadd.f32 %v186, %v207
    %209 = vdwg.mxu0
    %vm210 = vcmask 64512
    %v212 = vsel %vm210, %v177, 0
    %v215 = vsel %vm210, %v180, 0
    %v218 = vsel %vm210, %v205, 0
    %v221 = vsel %vm210, %v208, 0
    %223 = vmatpush.xpose.msra.mxu0 0.0
    %224 = vmatpush.xpose.msra.mxu0 0.0
    %225 = vmatpush.xpose.msra.mxu0 0.0
    %226 = vmatpush.xpose.msra.mxu0 0.0
    %227 = vmatpush.xpose.msra.mxu0 0.0
    %228 = vmatpush.xpose.msra.mxu0 0.0
    %229 = vmatpush.xpose.msra.mxu0 0.0
    %230 = vmatpush.xpose.msra.mxu0 0.0
    %231 = vmatpush.xpose.msra.mxu0 0.0
    %232 = vmatpush.xpose.msra.mxu0 0.0
    %233 = vmatpush.xpose.msra.mxu0 0.0
    %234 = vmatpush.xpose.msra.mxu0 0.0
    %235 = vmatpush.xpose.msra.mxu0 0.0
    %236 = vmatpush.xpose.msra.mxu0 0.0
    %237 = vmatpush.xpose.msra.mxu0 %v221
    %238 = vmatpush.xpose.msra.mxu0 %v218
    %239 = vmatmul.f32.gmra.mxu0 %v212
    %v240 = vpop.f32.mrf.mxu0
    %v241 = vadd.f32 0.0, %v240
    %242 = vmatmul.f32.gmra.mxu0 %v215
    %v243 = vpop.f32.mrf.mxu0
    %v244 = vadd.f32 0.0, %v243
    %245 = vdwg.mxu0
    %246 = vrot.lane.b32.xlu0 %v177, 120
    %v247 = vpop.permute.xlu0 %246
    %248 = vrot.lane.b32.xlu0 %v180, 120
    %v249 = vpop.permute.xlu0 %248
    %250 = vrot.lane.b32.xlu0 %v205, 120
    %v251 = vpop.permute.xlu0 %250
    %252 = vrot.lane.b32.xlu0 %v208, 120
    %v253 = vpop.permute.xlu0 %252
    %v254 = vsel %vm210, %v247, 0
    %v256 = vsel %vm210, %v249, 0
    %v258 = vsel %vm210, %v251, 0
    %v260 = vsel %vm210, %v253, 0
    %262 = vmatpush.xpose.msra.mxu0 0.0
    %263 = vmatpush.xpose.msra.mxu0 0.0
    %264 = vmatpush.xpose.msra.mxu0 0.0
    %265 = vmatpush.xpose.msra.mxu0 0.0
    %266 = vmatpush.xpose.msra.mxu0 0.0
    %267 = vmatpush.xpose.msra.mxu0 0.0
    %268 = vmatpush.xpose.msra.mxu0 0.0
    %269 = vmatpush.xpose.msra.mxu0 0.0
    %270 = vmatpush.xpose.msra.mxu0 0.0
    %271 = vmatpush.xpose.msra.mxu0 0.0
    %272 = vmatpush.xpose.msra.mxu0 0.0
    %273 = vmatpush.xpose.msra.mxu0 0.0
    %274 = vmatpush.xpose.msra.mxu0 0.0
    %275 = vmatpush.xpose.msra.mxu0 0.0
    %276 = vmatpush.xpose.msra.mxu0 %v260
    %277 = vmatpush.xpose.msra.mxu0 %v258
    %278 = vmatmul.f32.gmra.mxu0 %v254
    %v279 = vpop.f32.mrf.mxu0
    %v280 = vadd.f32 0.0, %v279
    %281 = vmatmul.f32.gmra.mxu0 %v256
    %v282 = vpop.f32.mrf.mxu0
    %v283 = vadd.f32 0.0, %v282
    %284 = vdwg.mxu0
    %285 = vrot.lane.b32.xlu0 %v177, 112
    %v286 = vpop.permute.xlu0 %285
    %287 = vrot.lane.b32.xlu0 %v180, 112
    %v288 = vpop.permute.xlu0 %287
    %289 = vrot.lane.b32.xlu0 %v205, 112
    %v290 = vpop.permute.xlu0 %289
    %291 = vrot.lane.b32.xlu0 %v208, 112
    %v292 = vpop.permute.xlu0 %291
    %v293 = vsel %vm210, %v286, 0
    %v295 = vsel %vm210, %v288, 0
    %v297 = vsel %vm210, %v290, 0
    %v299 = vsel %vm210, %v292, 0
    %301 = vmatpush.xpose.msra.mxu0 0.0
    %302 = vmatpush.xpose.msra.mxu0 0.0
    %303 = vmatpush.xpose.msra.mxu0 0.0
    %304 = vmatpush.xpose.msra.mxu0 0.0
    %305 = vmatpush.xpose.msra.mxu0 0.0
    %306 = vmatpush.xpose.msra.mxu0 0.0
    %307 = vmatpush.xpose.msra.mxu0 0.0
    %308 = vmatpush.xpose.msra.mxu0 0.0
    %309 = vmatpush.xpose.msra.mxu0 0.0
    %310 = vmatpush.xpose.msra.mxu0 0.0
    %311 = vmatpush.xpose.msra.mxu0 0.0
    %312 = vmatpush.xpose.msra.mxu0 0.0
    %313 = vmatpush.xpose.msra.mxu0 0.0
    %314 = vmatpush.xpose.msra.mxu0 0.0
    %315 = vmatpush.xpose.msra.mxu0 %v299
    %316 = vmatpush.xpose.msra.mxu0 %v297
    %317 = vmatmul.f32.gmra.mxu0 %v293
    %v318 = vpop.f32.mrf.mxu0
    %v319 = vadd.f32 0.0, %v318
    %320 = vmatmul.f32.gmra.mxu0 %v295
    %v321 = vpop.f32.mrf.mxu0
    %v322 = vadd.f32 0.0, %v321
    %323 = vdwg.mxu0
    %324 = vrot.lane.b32.xlu0 %v177, 104
    %v325 = vpop.permute.xlu0 %324
    %326 = vrot.lane.b32.xlu0 %v180, 104
    %v327 = vpop.permute.xlu0 %326
    %328 = vrot.lane.b32.xlu0 %v205, 104
    %v329 = vpop.permute.xlu0 %328
    %330 = vrot.lane.b32.xlu0 %v208, 104
    %v331 = vpop.permute.xlu0 %330
    %v332 = vsel %vm210, %v325, 0
    %v334 = vsel %vm210, %v327, 0
    %v336 = vsel %vm210, %v329, 0
    %v338 = vsel %vm210, %v331, 0
    %340 = vmatpush.xpose.msra.mxu0 0.0
    %341 = vmatpush.xpose.msra.mxu0 0.0
    %342 = vmatpush.xpose.msra.mxu0 0.0
    %343 = vmatpush.xpose.msra.mxu0 0.0
    %344 = vmatpush.xpose.msra.mxu0 0.0
    %345 = vmatpush.xpose.msra.mxu0 0.0
    %346 = vmatpush.xpose.msra.mxu0 0.0
    %347 = vmatpush.xpose.msra.mxu0 0.0
    %348 = vmatpush.xpose.msra.mxu0 0.0
    %349 = vmatpush.xpose.msra.mxu0 0.0
    %350 = vmatpush.xpose.msra.mxu0 0.0
    %351 = vmatpush.xpose.msra.mxu0 0.0
    %352 = vmatpush.xpose.msra.mxu0 0.0
    %353 = vmatpush.xpose.msra.mxu0 0.0
    %354 = vmatpush.xpose.msra.mxu0 %v338
    %355 = vmatpush.xpose.msra.mxu0 %v336
    %356 = vmatmul.f32.gmra.mxu0 %v332
    %v357 = vpop.f32.mrf.mxu0
    %v358 = vadd.f32 0.0, %v357
    %359 = vmatmul.f32.gmra.mxu0 %v334
    %v360 = vpop.f32.mrf.mxu0
    %v361 = vadd.f32 0.0, %v360
    %362 = vdwg.mxu0
    %v363 = vld [vmem:[%s0] sm:$0xff]
    %v364 = vld [vmem:[%s0 + $0x18] sm:$0xff]
    %v365 = vld [vmem:[%s0 + $0x30] sm:$0xff]
    %v366 = vld [vmem:[%s0 + $0x48] sm:$0xff]
    %v367 = vld [vmem:[%s0 + $0x60] sm:$0xff]
    %v368 = vld [vmem:[%s0 + $0x78] sm:$0xff]
    %v369 = vld [vmem:[%s0 + $0x90] sm:$0xff]
    %v370 = vld [vmem:[%s0 + $0xa8] sm:$0xff]
    %v371 = vadd.f32 %v241, %v363
    %v372 = vadd.f32 %v244, %v364
    %v373 = vadd.f32 %v280, %v365
    %v374 = vadd.f32 %v283, %v366
    %v375 = vadd.f32 %v319, %v367
    %v376 = vadd.f32 %v322, %v368
    %v377 = vadd.f32 %v358, %v369
    %v378 = vadd.f32 %v361, %v370
    %vm379 = vcmask 130048
    %v380 = vsel %vm379, %v371, -inf
    %381 = vmax.xlane.f32.xlu0 %v380
    %v382 = vpop.xlane.xlu0 %381
    %v383 = vsel %vm379, %v372, -inf
    %384 = vmax.xlane.f32.xlu0 %v383
    %v385 = vpop.xlane.xlu0 %384
    %v386 = vsel %vm379, %v373, -inf
    %387 = vmax.xlane.f32.xlu0 %v386
    %v388 = vpop.xlane.xlu0 %387
    %v389 = vsel %vm379, %v374, -inf
    %390 = vmax.xlane.f32.xlu0 %v389
    %v391 = vpop.xlane.xlu0 %390
    %v392 = vsel %vm379, %v375, -inf
    %393 = vmax.xlane.f32.xlu0 %v392
    %v394 = vpop.xlane.xlu0 %393
    %v395 = vsel %vm379, %v376, -inf
    %396 = vmax.xlane.f32.xlu0 %v395
    %v397 = vpop.xlane.xlu0 %396
    %v398 = vsel %vm379, %v377, -inf
    %399 = vmax.xlane.f32.xlu0 %v398
    %v400 = vpop.xlane.xlu0 %399
    %v401 = vsel %vm379, %v378, -inf
    %402 = vmax.xlane.f32.xlu0 %v401
    %v403 = vpop.xlane.xlu0 %402
    %v404 = vsub.f32 %v371, %v382
    %v405 = vsub.f32 %v372, %v385
    %v406 = vsub.f32 %v373, %v388
    %v407 = vsub.f32 %v374, %v391
    %v408 = vsub.f32 %v375, %v394
    %v409 = vsub.f32 %v376, %v397
    %v410 = vsub.f32 %v377, %v400
    %v411 = vsub.f32 %v378, %v403
    %v412 = vmul.f32 %v404, 1.442695
    %v413 = vpow.pop %v412
    %v414 = vmul.f32 %v405, 1.442695
    %v415 = vpow.pop %v414
    %v416 = vmul.f32 %v406, 1.442695
    %v417 = vpow.pop %v416
    %v418 = vmul.f32 %v407, 1.442695
    %v419 = vpow.pop %v418
    %v420 = vmul.f32 %v408, 1.442695
    %v421 = vpow.pop %v420
    %v422 = vmul.f32 %v409, 1.442695
    %v423 = vpow.pop %v422
    %v424 = vmul.f32 %v410, 1.442695
    %v425 = vpow.pop %v424
    %v426 = vmul.f32 %v411, 1.442695
    %v427 = vpow.pop %v426
    %v428 = vsel %vm379, %v413, 0.0
    %429 = vadd.xlane.f32.xlu0 %v428
    %v430 = vpop.xlane.xlu0 %429
    %v431 = vsel %vm379, %v415, 0.0
    %432 = vadd.xlane.f32.xlu0 %v431
    %v433 = vpop.xlane.xlu0 %432
    %v434 = vsel %vm379, %v417, 0.0
    %435 = vadd.xlane.f32.xlu0 %v434
    %v436 = vpop.xlane.xlu0 %435
    %v437 = vsel %vm379, %v419, 0.0
    %438 = vadd.xlane.f32.xlu0 %v437
    %v439 = vpop.xlane.xlu0 %438
    %v440 = vsel %vm379, %v421, 0.0
    %441 = vadd.xlane.f32.xlu0 %v440
    %v442 = vpop.xlane.xlu0 %441
    %v443 = vsel %vm379, %v423, 0.0
    %444 = vadd.xlane.f32.xlu0 %v443
    %v445 = vpop.xlane.xlu0 %444
    %v446 = vsel %vm379, %v425, 0.0
    %447 = vadd.xlane.f32.xlu0 %v446
    %v448 = vpop.xlane.xlu0 %447
    %v449 = vsel %vm379, %v427, 0.0
    %450 = vadd.xlane.f32.xlu0 %v449
    %v451 = vpop.xlane.xlu0 %450
    %v452 = vrcp.pop %v430
    %v453 = vrcp.pop %v433
    %v454 = vrcp.pop %v436
    %v455 = vrcp.pop %v439
    %v456 = vrcp.pop %v442
    %v457 = vrcp.pop %v445
    %v458 = vrcp.pop %v448
    %v459 = vrcp.pop %v451
    %v460 = vmul.f32 %v413, %v452
    %v461 = vmul.f32 %v415, %v453
    %v462 = vmul.f32 %v417, %v454
    %v463 = vmul.f32 %v419, %v455
    %v464 = vmul.f32 %v421, %v456
    %v465 = vmul.f32 %v423, %v457
    %v466 = vmul.f32 %v425, %v458
    %v467 = vmul.f32 %v427, %v459
    %v468 = vld [vmem:[#allocation2 + $0x20] sm:$0xff]
    %v469 = vld [vmem:[#allocation2 + $0x88] sm:$0xff]
    %v470 = vld [vmem:[#allocation2 + $0xf0] sm:$0xff]
    %v471 = vld [vmem:[#allocation2 + $0x158] sm:$0xff]
    %472 = vmatpush.msra.mxu0 0.0
    %473 = vmatpush.msra.mxu0 0.0
    %474 = vmatpush.msra.mxu0 0.0
    %475 = vmatpush.msra.mxu0 0.0
    %476 = vmatpush.msra.mxu0 0.0
    %477 = vmatpush.msra.mxu0 0.0
    %478 = vmatpush.msra.mxu0 0.0
    %479 = vmatpush.msra.mxu0 0.0
    %480 = vmatpush.msra.mxu0 0.0
    %481 = vmatpush.msra.mxu0 0.0
    %482 = vmatpush.msra.mxu0 0.0
    %483 = vmatpush.msra.mxu0 0.0
    %484 = vmatpush.msra.mxu0 %v471
    %485 = vmatpush.msra.mxu0 %v470
    %486 = vmatpush.msra.mxu0 %v469
    %487 = vmatpush.msra.mxu0 %v468
    %488 = vmatmul.f32.gmra.mxu0 %v154
    %v489 = vpop.f32.mrf.mxu0
    %v490 = vadd.f32 0.0, %v489
    %491 = vmatmul.f32.gmra.mxu0 %v157
    %v492 = vpop.f32.mrf.mxu0
    %v493 = vadd.f32 0.0, %v492
    %494 = vdwg.mxu0
    %v495 = vld [vmem:[#allocation2 + $0x28] sm:$0xff]
    %v496 = vld [vmem:[#allocation2 + $0x90] sm:$0xff]
    %v497 = vld [vmem:[#allocation2 + $0xf8] sm:$0xff]
    %v498 = vld [vmem:[#allocation2 + $0x160] sm:$0xff]
    %499 = vmatpush.msra.mxu0 0.0
    %500 = vmatpush.msra.mxu0 0.0
    %501 = vmatpush.msra.mxu0 0.0
    %502 = vmatpush.msra.mxu0 0.0
    %503 = vmatpush.msra.mxu0 0.0
    %504 = vmatpush.msra.mxu0 0.0
    %505 = vmatpush.msra.mxu0 0.0
    %506 = vmatpush.msra.mxu0 0.0
    %507 = vmatpush.msra.mxu0 0.0
    %508 = vmatpush.msra.mxu0 0.0
    %509 = vmatpush.msra.mxu0 0.0
    %510 = vmatpush.msra.mxu0 0.0
    %511 = vmatpush.msra.mxu0 %v498
    %512 = vmatpush.msra.mxu0 %v497
    %513 = vmatpush.msra.mxu0 %v496
    %514 = vmatpush.msra.mxu0 %v495
    %515 = vmatmul.f32.gmra.mxu0 %v154
    %v516 = vpop.f32.mrf.mxu0
    %v517 = vadd.f32 0.0, %v516
    %518 = vmatmul.f32.gmra.mxu0 %v157
    %v519 = vpop.f32.mrf.mxu0
    %v520 = vadd.f32 0.0, %v519
    %521 = vdwg.mxu0
    %v523 = vsel %vm379, %v462, 0
    %v526 = vsel %vm379, %v463, 0
    %528 = vmatpush.msra.mxu0 0.0
    %529 = vmatpush.msra.mxu0 0.0
    %530 = vmatpush.msra.mxu0 0.0
    %531 = vmatpush.msra.mxu0 0.0
    %532 = vmatpush.msra.mxu0 0.0
    %533 = vmatpush.msra.mxu0 0.0
    %534 = vmatpush.msra.mxu0 0.0
    %535 = vmatpush.msra.mxu0 0.0
    %536 = vmatpush.msra.mxu0 0.0
    %537 = vmatpush.msra.mxu0 0.0
    %538 = vmatpush.msra.mxu0 0.0
    %539 = vmatpush.msra.mxu0 0.0
    %540 = vmatpush.msra.mxu0 0.0
    %541 = vmatpush.msra.mxu0 0.0
    %542 = vmatpush.msra.mxu0 %v520
    %543 = vmatpush.msra.mxu0 %v517
    %544 = vmatmul.f32.gmra.mxu0 %v523
    %v545 = vpop.f32.mrf.mxu0
    %v546 = vadd.f32 0.0, %v545
    %547 = vmatmul.f32.gmra.mxu0 %v526
    %v548 = vpop.f32.mrf.mxu0
    %v549 = vadd.f32 0.0, %v548
    %550 = vdwg.mxu0
    %v552 = vsel %vm379, %v460, 0
    %v555 = vsel %vm379, %v461, 0
    %557 = vmatpush.msra.mxu0 0.0
    %558 = vmatpush.msra.mxu0 0.0
    %559 = vmatpush.msra.mxu0 0.0
    %560 = vmatpush.msra.mxu0 0.0
    %561 = vmatpush.msra.mxu0 0.0
    %562 = vmatpush.msra.mxu0 0.0
    %563 = vmatpush.msra.mxu0 0.0
    %564 = vmatpush.msra.mxu0 0.0
    %565 = vmatpush.msra.mxu0 0.0
    %566 = vmatpush.msra.mxu0 0.0
    %567 = vmatpush.msra.mxu0 0.0
    %568 = vmatpush.msra.mxu0 0.0
    %569 = vmatpush.msra.mxu0 0.0
    %570 = vmatpush.msra.mxu0 0.0
    %571 = vmatpush.msra.mxu0 %v493
    %572 = vmatpush.msra.mxu0 %v490
    %573 = vmatmul.f32.gmra.mxu0 %v552
    %v574 = vpop.f32.mrf.mxu0
    %v575 = vadd.f32 %v546, %v574
    %576 = vmatmul.f32.gmra.mxu0 %v555
    %v577 = vpop.f32.mrf.mxu0
    %v578 = vadd.f32 %v549, %v577
    %579 = vdwg.mxu0
    %v580 = vld [vmem:[#allocation2 + $0x30] sm:$0xff]
    %v581 = vld [vmem:[#allocation2 + $0x98] sm:$0xff]
    %v582 = vld [vmem:[#allocation2 + $0x100] sm:$0xff]
    %v583 = vld [vmem:[#allocation2 + $0x168] sm:$0xff]
    %584 = vmatpush.msra.mxu0 0.0
    %585 = vmatpush.msra.mxu0 0.0
    %586 = vmatpush.msra.mxu0 0.0
    %587 = vmatpush.msra.mxu0 0.0
    %588 = vmatpush.msra.mxu0 0.0
    %589 = vmatpush.msra.mxu0 0.0
    %590 = vmatpush.msra.mxu0 0.0
    %591 = vmatpush.msra.mxu0 0.0
    %592 = vmatpush.msra.mxu0 0.0
    %593 = vmatpush.msra.mxu0 0.0
    %594 = vmatpush.msra.mxu0 0.0
    %595 = vmatpush.msra.mxu0 0.0
    %596 = vmatpush.msra.mxu0 %v583
    %597 = vmatpush.msra.mxu0 %v582
    %598 = vmatpush.msra.mxu0 %v581
    %599 = vmatpush.msra.mxu0 %v580
    %600 = vmatmul.f32.gmra.mxu0 %v154
    %v601 = vpop.f32.mrf.mxu0
    %v602 = vadd.f32 0.0, %v601
    %603 = vmatmul.f32.gmra.mxu0 %v157
    %v604 = vpop.f32.mrf.mxu0
    %v605 = vadd.f32 0.0, %v604
    %606 = vdwg.mxu0
    %v608 = vsel %vm379, %v464, 0
    %v611 = vsel %vm379, %v465, 0
    %613 = vmatpush.msra.mxu0 0.0
    %614 = vmatpush.msra.mxu0 0.0
    %615 = vmatpush.msra.mxu0 0.0
    %616 = vmatpush.msra.mxu0 0.0
    %617 = vmatpush.msra.mxu0 0.0
    %618 = vmatpush.msra.mxu0 0.0
    %619 = vmatpush.msra.mxu0 0.0
    %620 = vmatpush.msra.mxu0 0.0
    %621 = vmatpush.msra.mxu0 0.0
    %622 = vmatpush.msra.mxu0 0.0
    %623 = vmatpush.msra.mxu0 0.0
    %624 = vmatpush.msra.mxu0 0.0
    %625 = vmatpush.msra.mxu0 0.0
    %626 = vmatpush.msra.mxu0 0.0
    %627 = vmatpush.msra.mxu0 %v605
    %628 = vmatpush.msra.mxu0 %v602
    %629 = vmatmul.f32.gmra.mxu0 %v608
    %v630 = vpop.f32.mrf.mxu0
    %v631 = vadd.f32 0.0, %v630
    %632 = vmatmul.f32.gmra.mxu0 %v611
    %v633 = vpop.f32.mrf.mxu0
    %v634 = vadd.f32 0.0, %v633
    %635 = vdwg.mxu0
    %v636 = vadd.f32 %v575, %v631
    %v637 = vadd.f32 %v578, %v634
    %v638 = vld [vmem:[#allocation2 + $0x38] sm:$0xff]
    %v639 = vld [vmem:[#allocation2 + $0xa0] sm:$0xff]
    %v640 = vld [vmem:[#allocation2 + $0x108] sm:$0xff]
    %v641 = vld [vmem:[#allocation2 + $0x170] sm:$0xff]
    %642 = vmatpush.msra.mxu0 0.0
    %643 = vmatpush.msra.mxu0 0.0
    %644 = vmatpush.msra.mxu0 0.0
    %645 = vmatpush.msra.mxu0 0.0
    %646 = vmatpush.msra.mxu0 0.0
    %647 = vmatpush.msra.mxu0 0.0
    %648 = vmatpush.msra.mxu0 0.0
    %649 = vmatpush.msra.mxu0 0.0
    %650 = vmatpush.msra.mxu0 0.0
    %651 = vmatpush.msra.mxu0 0.0
    %652 = vmatpush.msra.mxu0 0.0
    %653 = vmatpush.msra.mxu0 0.0
    %654 = vmatpush.msra.mxu0 %v641
    %655 = vmatpush.msra.mxu0 %v640
    %656 = vmatpush.msra.mxu0 %v639
    %657 = vmatpush.msra.mxu0 %v638
    %658 = vmatmul.f32.gmra.mxu0 %v154
    %v659 = vpop.f32.mrf.mxu0
    %v660 = vadd.f32 0.0, %v659
    %661 = vmatmul.f32.gmra.mxu0 %v157
    %v662 = vpop.f32.mrf.mxu0
    %v663 = vadd.f32 0.0, %v662
    %664 = vdwg.mxu0
    %v666 = vsel %vm379, %v466, 0
    %v669 = vsel %vm379, %v467, 0
    %671 = vmatpush.msra.mxu0 0.0
    %672 = vmatpush.msra.mxu0 0.0
    %673 = vmatpush.msra.mxu0 0.0
    %674 = vmatpush.msra.mxu0 0.0
    %675 = vmatpush.msra.mxu0 0.0
    %676 = vmatpush.msra.mxu0 0.0
    %677 = vmatpush.msra.mxu0 0.0
    %678 = vmatpush.msra.mxu0 0.0
    %679 = vmatpush.msra.mxu0 0.0
    %680 = vmatpush.msra.mxu0 0.0
    %681 = vmatpush.msra.mxu0 0.0
    %682 = vmatpush.msra.mxu0 0.0
    %683 = vmatpush.msra.mxu0 0.0
    %684 = vmatpush.msra.mxu0 0.0
    %685 = vmatpush.msra.mxu0 %v663
    %686 = vmatpush.msra.mxu0 %v660
    %687 = vmatmul.f32.gmra.mxu0 %v666
    %v688 = vpop.f32.mrf.mxu0
    %v689 = vadd.f32 0.0, %v688
    %690 = vmatmul.f32.gmra.mxu0 %v669
    %v691 = vpop.f32.mrf.mxu0
    %v692 = vadd.f32 0.0, %v691
    %693 = vdwg.mxu0
    %v694 = vadd.f32 %v636, %v689
    %v695 = vadd.f32 %v637, %v692
    %v696 = vperm.slane %v27, 2
    %v697 = vadd.f32 %v694, %v696
    %v698 = vadd.f32 %v695, %v696
    %v699 = vadd.f32 %v146, %v697
    %v700 = vadd.f32 %v147, %v698
    %v701 = vsel %vm90, %v699, 0.0
    %702 = vadd.xlane.f32.xlu0 %v701
    %v703 = vpop.xlane.xlu0 %702
    %v704 = vsel %vm90, %v700, 0.0
    %705 = vadd.xlane.f32.xlu0 %v704
    %v706 = vpop.xlane.xlu0 %705
    %v707 = vmul.f32 %v703, %v103
    %v708 = vmul.f32 %v706, %v103
    %v709 = vsub.f32 %v699, %v707
    %v710 = vsub.f32 %v700, %v708
    %v711 = vmul.f32 %v709, %v709
    %v712 = vmul.f32 %v710, %v710
    %v713 = vsel %vm90, %v711, 0.0
    %714 = vadd.xlane.f32.xlu0 %v713
    %v715 = vpop.xlane.xlu0 %714
    %v716 = vsel %vm90, %v712, 0.0
    %717 = vadd.xlane.f32.xlu0 %v716
    %v718 = vpop.xlane.xlu0 %717
    %v719 = vmul.f32 %v715, %v103
    %v720 = vmul.f32 %v718, %v103
    %v721 = vadd.f32 %v719, 1e-12
    %v722 = vadd.f32 %v720, 1e-12
    %v723 = vrsqrt.pop %v721
    %v724 = vmul.f32 %v723, %v721
    %v725 = vmul.f32 %v724, %v723
    %v726 = vmul.f32 0.5, %v725
    %v727 = vsub.f32 1.5, %v726
    %v728 = vmul.f32 %v723, %v727
    %vm729 = vweird.f32 %v721
    %vm730 = vweird.f32 %v723
    %vm731 = vmor %vm729, %vm730
    %v732 = vsel %vm731, %v723, %v728
    %v733 = vrsqrt.pop %v722
    %v734 = vmul.f32 %v733, %v722
    %v735 = vmul.f32 %v734, %v733
    %v736 = vmul.f32 0.5, %v735
    %v737 = vsub.f32 1.5, %v736
    %v738 = vmul.f32 %v733, %v737
    %vm739 = vweird.f32 %v722
    %vm740 = vweird.f32 %v733
    %vm741 = vmor %vm739, %vm740
    %v742 = vsel %vm741, %v733, %v738
    %v743 = vmul.f32 %v709, %v732
    %v744 = vmul.f32 %v710, %v742
    %v745 = vperm.slane %v27, 7
    %v746 = vmul.f32 %v743, %v745
    %v747 = vmul.f32 %v744, %v745
    %v748 = vperm.slane %v28, 0
    %v749 = vadd.f32 %v746, %v748
    %v750 = vadd.f32 %v747, %v748
    %v751 = vld [vmem:[#allocation2 + $0x40] sm:$0xff]
    %v752 = vld [vmem:[#allocation2 + $0xa8] sm:$0xff]
    %v753 = vld [vmem:[#allocation2 + $0x110] sm:$0xff]
    %v754 = vld [vmem:[#allocation2 + $0x178] sm:$0xff]
    %v755 = vperm.slane %v27, 3
    %v757 = vsel %vm90, %v749, 0
    %v760 = vsel %vm90, %v750, 0
    %762 = vmatpush.msra.mxu0 0.0
    %763 = vmatpush.msra.mxu0 0.0
    %764 = vmatpush.msra.mxu0 0.0
    %765 = vmatpush.msra.mxu0 0.0
    %766 = vmatpush.msra.mxu0 0.0
    %767 = vmatpush.msra.mxu0 0.0
    %768 = vmatpush.msra.mxu0 0.0
    %769 = vmatpush.msra.mxu0 0.0
    %770 = vmatpush.msra.mxu0 0.0
    %771 = vmatpush.msra.mxu0 0.0
    %772 = vmatpush.msra.mxu0 0.0
    %773 = vmatpush.msra.mxu0 0.0
    %774 = vmatpush.msra.mxu0 %v754
    %775 = vmatpush.msra.mxu0 %v753
    %776 = vmatpush.msra.mxu0 %v752
    %777 = vmatpush.msra.mxu0 %v751
    %778 = vmatmul.f32.gmra.mxu0 %v757
    %v779 = vpop.f32.mrf.mxu0
    %v780 = vadd.f32 %v755, %v779
    %781 = vmatmul.f32.gmra.mxu0 %v760
    %v782 = vpop.f32.mrf.mxu0
    %v783 = vadd.f32 %v755, %v782
    %784 = vdwg.mxu0
    %v785 = vmul.f32 %v780, 0.5
    %v786 = vmul.f32 %v783, 0.5
    %v787 = vmul.f32 %v780, 0.044715
    %v788 = vmul.f32 %v783, 0.044715
    %v789 = vmul.f32 %v787, %v780
    %v790 = vmul.f32 %v788, %v783
    %v791 = vmul.f32 %v789, %v780
    %v792 = vmul.f32 %v790, %v783
    %v793 = vadd.f32 %v780, %v791
    %v794 = vadd.f32 %v783, %v792
    %v795 = vmul.f32 %v793, 0.7978846
    %v796 = vmul.f32 %v794, 0.7978846
    %v797 = vtanh.pop %v795
    %v798 = vtanh.pop %v796
    %v799 = vadd.f32 %v797, 1.0
    %v800 = vadd.f32 %v798, 1.0
    %v801 = vmul.f32 %v785, %v799
    %v802 = vmul.f32 %v786, %v800
    %v803 = vld [vmem:[#allocation2 + $0x48] sm:$0xff]
    %v804 = vld [vmem:[#allocation2 + $0xb0] sm:$0xff]
    %v805 = vld [vmem:[#allocation2 + $0x118] sm:$0xff]
    %v806 = vld [vmem:[#allocation2 + $0x180] sm:$0xff]
    %v807 = vld [vmem:[#allocation2 + $0x1e8] sm:$0xff]
    %v808 = vld [vmem:[#allocation2 + $0x250] sm:$0xff]
    %v809 = vld [vmem:[#allocation2 + $0x2b8] sm:$0xff]
    %v810 = vld [vmem:[#allocation2 + $0x320] sm:$0xff]
    %v811 = vperm.slane %v27, 4
    %v813 = vsel %vm60, %v801, 0
    %v816 = vsel %vm60, %v802, 0
    %818 = vmatpush.msra.mxu0 0.0
    %819 = vmatpush.msra.mxu0 0.0
    %820 = vmatpush.msra.mxu0 0.0
    %821 = vmatpush.msra.mxu0 0.0
    %822 = vmatpush.msra.mxu0 0.0
    %823 = vmatpush.msra.mxu0 0.0
    %824 = vmatpush.msra.mxu0 0.0
    %825 = vmatpush.msra.mxu0 0.0
    %826 = vmatpush.msra.mxu0 %v810
    %827 = vmatpush.msra.mxu0 %v809
    %828 = vmatpush.msra.mxu0 %v808
    %829 = vmatpush.msra.mxu0 %v807
    %830 = vmatpush.msra.mxu0 %v806
    %831 = vmatpush.msra.mxu0 %v805
    %832 = vmatpush.msra.mxu0 %v804
    %833 = vmatpush.msra.mxu0 %v803
    %834 = vmatmul.f32.gmra.mxu0 %v813
    %v835 = vpop.f32.mrf.mxu0
    %v836 = vadd.f32 %v811, %v835
    %837 = vmatmul.f32.gmra.mxu0 %v816
    %v838 = vpop.f32.mrf.mxu0
    %v839 = vadd.f32 %v811, %v838
    %840 = vdwg.mxu0
    %v841 = vadd.f32 %v749, %v836
    %v842 = vadd.f32 %v750, %v839
    %v843 = vsel %vm90, %v841, 0.0
    %844 = vadd.xlane.f32.xlu0 %v843
    %v845 = vpop.xlane.xlu0 %844
    %v846 = vsel %vm90, %v842, 0.0
    %847 = vadd.xlane.f32.xlu0 %v846
    %v848 = vpop.xlane.xlu0 %847
    %v849 = vmul.f32 %v845, %v103
    %v850 = vmul.f32 %v848, %v103
    %v851 = vsub.f32 %v841, %v849
    %v852 = vsub.f32 %v842, %v850
    %v853 = vmul.f32 %v851, %v851
    %v854 = vmul.f32 %v852, %v852
    %v855 = vsel %vm90, %v853, 0.0
    %856 = vadd.xlane.f32.xlu0 %v855
    %v857 = vpop.xlane.xlu0 %856
    %v858 = vsel %vm90, %v854, 0.0
    %859 = vadd.xlane.f32.xlu0 %v858
    %v860 = vpop.xlane.xlu0 %859
    %v861 = vmul.f32 %v857, %v103
    %v862 = vmul.f32 %v860, %v103
    %v863 = vadd.f32 %v861, 1e-12
    %v864 = vadd.f32 %v862, 1e-12
    %v865 = vrsqrt.pop %v863
    %v866 = vmul.f32 %v865, %v863
    %v867 = vmul.f32 %v866, %v865
    %v868 = vmul.f32 0.5, %v867
    %v869 = vsub.f32 1.5, %v868
    %v870 = vmul.f32 %v865, %v869
    %vm871 = vweird.f32 %v863
    %vm872 = vweird.f32 %v865
    %vm873 = vmor %vm871, %vm872
    %v874 = vsel %vm873, %v865, %v870
    %v875 = vrsqrt.pop %v864
    %v876 = vmul.f32 %v875, %v864
    %v877 = vmul.f32 %v876, %v875
    %v878 = vmul.f32 0.5, %v877
    %v879 = vsub.f32 1.5, %v878
    %v880 = vmul.f32 %v875, %v879
    %vm881 = vweird.f32 %v864
    %vm882 = vweird.f32 %v875
    %vm883 = vmor %vm881, %vm882
    %v884 = vsel %vm883, %v875, %v880
    %v885 = vmul.f32 %v851, %v874
    %v886 = vmul.f32 %v852, %v884
    %v887 = vperm.slane %v28, 1
    %v888 = vmul.f32 %v885, %v887
    %v889 = vmul.f32 %v886, %v887
    %v890 = vperm.slane %v28, 2
    %v891 = vadd.f32 %v888, %v890
    %v892 = vadd.f32 %v889, %v890
    %v894 = vrot.slane %v892, 7
    %vm896 = vcmask 1040384
    %v897 = vsel %vm896, %v891, %v894
    %v898 = vld [vmem:[#allocation2 + $0x50] sm:$0xff]
    %v899 = vld [vmem:[#allocation2 + $0xb8] sm:$0xff]
    %v900 = vld [vmem:[#allocation2 + $0x120] sm:$0xff]
    %v901 = vld [vmem:[#allocation2 + $0x188] sm:$0xff]
    %v902 = vperm.slane %v28, 3
    %v904 = vsel %vm90, %v897, 0
    %906 = vmatpush.msra.mxu0 0.0
    %907 = vmatpush.msra.mxu0 0.0
    %908 = vmatpush.msra.mxu0 0.0
    %909 = vmatpush.msra.mxu0 0.0
    %910 = vmatpush.msra.mxu0 0.0
    %911 = vmatpush.msra.mxu0 0.0
    %912 = vmatpush.msra.mxu0 0.0
    %913 = vmatpush.msra.mxu0 0.0
    %914 = vmatpush.msra.mxu0 0.0
    %915 = vmatpush.msra.mxu0 0.0
    %916 = vmatpush.msra.mxu0 0.0
    %917 = vmatpush.msra.mxu0 0.0
    %918 = vmatpush.msra.mxu0 %v901
    %919 = vmatpush.msra.mxu0 %v900
    %920 = vmatpush.msra.mxu0 %v899
    %921 = vmatpush.msra.mxu0 %v898
    %922 = vmatmul.f32.gmra.mxu0 %v904
    %v923 = vpop.f32.mrf.mxu0
    %v924 = vadd.f32 %v902, %v923
    %925 = vdwg.mxu0
    %v926 = vmul.f32 %v924, 0.5
    %v927 = vmul.f32 %v924, 0.044715
    %v928 = vmul.f32 %v927, %v924
    %v929 = vmul.f32 %v928, %v924
    %v930 = vadd.f32 %v924, %v929
    %v931 = vmul.f32 %v930, 0.7978846
    %v932 = vtanh.pop %v931
    %v933 = vadd.f32 %v932, 1.0
    %v934 = vmul.f32 %v926, %v933
    %v935 = vld [vmem:[#allocation2 + $0x58] sm:$0xff]
    %v936 = vld [vmem:[#allocation2 + $0xc0] sm:$0xff]
    %v937 = vld [vmem:[#allocation2 + $0x128] sm:$0xff]
    %v938 = vld [vmem:[#allocation2 + $0x190] sm:$0xff]
    %v939 = vld [vmem:[#allocation2 + $0x1f8] sm:$0xff]
    %v940 = vperm.slane %v28, 4
    %vm941 = vcmask 326656
    %v943 = vsel %vm941, %v934, 0
    %945 = vmatpush.msra.mxu0 0.0
    %946 = vmatpush.msra.mxu0 0.0
    %947 = vmatpush.msra.mxu0 0.0
    %948 = vmatpush.msra.mxu0 0.0
    %949 = vmatpush.msra.mxu0 0.0
    %950 = vmatpush.msra.mxu0 0.0
    %951 = vmatpush.msra.mxu0 0.0
    %952 = vmatpush.msra.mxu0 0.0
    %953 = vmatpush.msra.mxu0 0.0
    %954 = vmatpush.msra.mxu0 0.0
    %955 = vmatpush.msra.mxu0 0.0
    %956 = vmatpush.msra.mxu0 %v939
    %957 = vmatpush.msra.mxu0 %v938
    %958 = vmatpush.msra.mxu0 %v937
    %959 = vmatpush.msra.mxu0 %v936
    %960 = vmatpush.msra.mxu0 %v935
    %961 = vmatmul.f32.gmra.mxu0 %v943
    %v962 = vpop.f32.mrf.mxu0
    %v963 = vadd.f32 %v940, %v962
    %964 = vdwg.mxu0
    %v965 = vld [vmem:[%s0 + $0x10] sm:$0x3]
    %vm966 = vcmp.ge.f32.partialorder %v965, 0.0
    %v967 = vsel %vm966, 1, 0
    %v968 = vcvt.s32.f32 %v967
    %v969 = vlaneseq
    %v970 = vshrl.u32 %v969, 7
    %vm971 = vcmp.le.s32.totalorder %v970, %v32
    %v972 = vsel %vm971, 1, 0
    %v973 = vcvt.s32.f32 %v972
    %vm974 = vcmask 39936
    %v976 = vsel %vm974, %v968, 0
    %vm978 = vcmask 1044480
    %v980 = vsel %vm978, %v973, 0
    %982 = vmatpush.msra.mxu0 0.0
    %983 = vmatpush.msra.mxu0 0.0
    %984 = vmatpush.msra.mxu0 0.0
    %985 = vmatpush.msra.mxu0 0.0
    %986 = vmatpush.msra.mxu0 0.0
    %987 = vmatpush.msra.mxu0 0.0
    %988 = vmatpush.msra.mxu0 0.0
    %989 = vmatpush.msra.mxu0 0.0
    %990 = vmatpush.msra.mxu0 0.0
    %991 = vmatpush.msra.mxu0 0.0
    %992 = vmatpush.msra.mxu0 0.0
    %993 = vmatpush.msra.mxu0 0.0
    %994 = vmatpush.msra.mxu0 0.0
    %995 = vmatpush.msra.mxu0 0.0
    %996 = vmatpush.msra.mxu0 0.0
    %997 = vmatpush.msra.mxu0 %v980
    %998 = vmatmul.f32.gmra.mxu0 %v976
    %v999 = vpop.f32.mrf.mxu0
    %v1000 = vadd.f32 0.0, %v999
    %1001 = vdwg.mxu0
    %v1002 = vadd.f32 %v33, 0.5
    %vm1003 = vcmp.gt.f32.partialorder %v1000, %v1002
    %v1004 = vsel %vm1003, 1, 0
    %v1005 = vcvt.s32.f32 %v1004
    %v1006 = vperm.slane %v965, 0
    %v1007 = vlaneseq
    %v1008 = vshrl.u32 %v1007, 7
    %1010 = vset.pattern.permute.xlu0 %v1008
    %1011 = vperm.xlu0 %1010, %v1006
    %v1012 = vpop.permute.xlu0 %1011
    %v1013 = vperm.slane %v965, 1
    %v1014 = vlaneseq
    %v1015 = vshrl.u32 %v1014, 7
    %1017 = vset.pattern.permute.xlu0 %v1015
    %1018 = vperm.xlu0 %1017, %v1013
    %v1019 = vpop.permute.xlu0 %1018
    %v1021 = vrot.slane %v33, 1
    %v1022 = vperm.slane %v33, 0
    %v1023 = vperm.slane %v1021, 0
    %vm1026 = vcmp.eq.f32.partialorder %v1012, %v1022
    %vm1027 = vcmp.eq.f32.partialorder %v1019, %v1023
    %v1028 = vsel %vm1026, 1, 0
    %v1029 = vsel %vm1027, 1, 0
    %v1030 = vcvt.s32.f32 %v1028
    %v1031 = vcvt.s32.f32 %v1029
    %v1032 = vperm.slane %v1005, 0
    %v1033 = vlaneseq
    %v1034 = vshrl.u32 %v1033, 7
    %1036 = vset.pattern.permute.xlu0 %v1034
    %1037 = vperm.xlu0 %1036, %v1032
    %v1038 = vpop.permute.xlu0 %1037
    %v1039 = vperm.slane %v1005, 1
    %v1040 = vlaneseq
    %v1041 = vshrl.u32 %v1040, 7
    %1043 = vset.pattern.permute.xlu0 %v1041
    %1044 = vperm.xlu0 %1043, %v1039
    %v1045 = vpop.permute.xlu0 %1044
    %v1046 = vmul.f32 %v1030, %v1038
    %v1047 = vmul.f32 %v1031, %v1045
    %vm1048 = vcmask 36864
    %v1049 = vsel %vm1048, %v1046, 0.0
    %v1050 = vrot.slane %v1049, 4
    %v1051 = vadd.f32 %v1049, %v1050
    %v1052 = vrot.slane %v1051, 2
    %v1053 = vadd.f32 %v1051, %v1052
    %v1054 = vrot.slane %v1053, 1
    %v1055 = vadd.f32 %v1053, %v1054
    %v1056 = vsel %vm1048, %v1047, 0.0
    %v1057 = vrot.slane %v1056, 4
    %v1058 = vadd.f32 %v1056, %v1057
    %v1059 = vrot.slane %v1058, 2
    %v1060 = vadd.f32 %v1058, %v1059
    %v1061 = vrot.slane %v1060, 1
    %v1062 = vadd.f32 %v1060, %v1061
    %vm1063 = vcmp.lt.f32.partialorder %v1055, 0.5
    %vm1064 = vcmp.lt.f32.partialorder %v1062, 0.5
    %v1065 = vsel %vm1063, 1, 0
    %v1066 = vsel %vm1064, 1, 0
    %v1067 = vcvt.s32.f32 %v1065
    %v1068 = vcvt.s32.f32 %v1066
    %v1070 = vrot.slane %v963, 1
    %v1071 = vperm.slane %v963, 0
    %v1072 = vperm.slane %v1070, 0
    %v1075 = vmul.f32 %v1030, %v1071
    %v1076 = vmul.f32 %v1031, %v1072
    %v1077 = vsel %vm1048, %v1075, 0.0
    %1078 = vadd.xlane.f32.xlu0 %v1077
    %v1079 = vpop.xlane.xlu0 %1078
    %v1080 = vsel %vm1048, %v1076, 0.0
    %1081 = vadd.xlane.f32.xlu0 %v1080
    %v1082 = vpop.xlane.xlu0 %1081
    %v1083 = vsub.f32 1.0, %v1079
    %v1084 = vsub.f32 1.0, %v1082
    %v1085 = vadd.f32 %v1083, %v1071
    %v1086 = vadd.f32 %v1084, %v1072
    %v1087 = vmax.f32 %v1085, 0.0
    %v1088 = vmax.f32 %v1086, 0.0
    %v1089 = vmul.f32 %v1038, %v1067
    %v1090 = vmul.f32 %v1045, %v1068
    %v1091 = vmul.f32 %v1087, %v1089
    %v1092 = vmul.f32 %v1088, %v1090
    %v1093 = vsel %vm1048, %v1091, 0.0
    %1094 = vadd.xlane.f32.xlu0 %v1093
    %v1095 = vpop.xlane.xlu0 %1094
    %v1096 = vsel %vm1048, %v1092, 0.0
    %1097 = vadd.xlane.f32.xlu0 %v1096
    %v1098 = vpop.xlane.xlu0 %1097
    %v1101 = vperm.slane %v1095, %v32
    %v1102 = vperm.slane %v1098, %v32
    %vm1103 = vcmask 1041409
    %v1104 = vsel %vm1103, %v1102, %v1101
    %vm1106 = vcmask 33792
    %v1107 = vsel %vm1106, %v1104, 0.0
    %1108 = vadd.xlane.f32.xlu0 %v1107
    %v1109 = vpop.xlane.xlu0 %1108
    %vm1110 = vcmask 1041408
    %v1111 = vsel %vm1110, %v1109, 0.0
    %v1112 = vrot.slane %v1111, 4
    %v1113 = vadd.f32 %v1111, %v1112
    %v1114 = vrot.slane %v1113, 2
    %v1115 = vadd.f32 %v1113, %v1114
    %v1116 = vrot.slane %v1115, 1
    %v1117 = vadd.f32 %v1115, %v1116
    %v1118 = vmul.f32 %v1117, 0.1
    %v1119 = vsel %vm974, %v963, 0.0
    %vm1120 = vcmask 7168
    %v1121 = vsel %vm1120, %v1118, 0.0
    %v1123 = vrot.slane %v1121, 6
    %v1125 = vsel %vm1110, %v1119, %v1123
    %vm1126 = vcmask 1042432
    %v1127 = vsel %vm1126, %v1125, 0.0
    %1128 = vst [vmem:[%s2] sm:$0xff] %v1127
    // Predicated region
    $region14: #{transformer_model_pairwise_forward.1} parent=1 // pred_check
      _
    $region15: #{transformer_model_pairwise_forward.1} parent=1 // pred_check_branch
      %1130 = sbr.rel (0) target = $region17
    $region16: #{transformer_model_pairwise_forward.1} parent=1 // pred_region
      _
    $region17: #{transformer_model_pairwise_forward.1} parent=1 // pred_fallthru
      _
    // Predicated region
    $region18: #{transformer_model_pairwise_forward.1} parent=1 // pred_check
      _
    $region19: #{transformer_model_pairwise_forward.1} parent=1 // pred_check_branch
      %1132 = sbr.rel (0) target = $region21
    $region20: #{transformer_model_pairwise_forward.1} parent=1 // pred_region
      _
    $region21: #{transformer_model_pairwise_forward.1} parent=1 // pred_fallthru
      _
    %1133 = vsyncpa [#allocation3], 1

</llo_original>
